<compile_context>
chip_gen: v5e
topology: v5e:2x2
jax: 0.10.0
libtpu: 0.0.40
codegen_flags: <defaults>
</compile_context>

<pallas_src>
import functools

import jax
import jax.numpy as jnp
from jax.experimental import pallas as pl
from jax.experimental.pallas import tpu as pltpu

LANE = 128                # TPU lane width; all feature dims are padded to this.
SMALL_FUSED_MAX = 2048    # n_pad at/below which the fully-fused kernel is used.


# ----------------------------------------------------------------------------
# small helpers
# ----------------------------------------------------------------------------
def _round_up(x, m):
    return ((x + m - 1) // m) * m


def padded_size(n):
    """Row padding: 128-aligned for the fused path, 512-aligned for tiled."""
    n_pad = _round_up(max(n, 8), 128)
    if n_pad > SMALL_FUSED_MAX:
        n_pad = _round_up(n_pad, 512)
    return n_pad


def _vmem_budget_bytes():
    """Per-generation VMEM budget (leave headroom for compiler scratch)."""
    cap = 64 * 1024 * 1024                                   # v7x per-TC floor
    try:
        cap = int(getattr(pltpu.get_tpu_info(), "vmem_capacity_bytes", cap))
    except Exception:
        pass
    # ~48 MiB on v7x (64 MiB physical), capped at ~100 MiB on v5e/v6e (128 MiB).
    return max(min(cap - 16 * 1024 * 1024, 100 * 1024 * 1024),
               32 * 1024 * 1024)


def _tiled_tiles(n_pad):
    """(tm, tk) for the streamed-A path; both must divide n_pad."""
    if n_pad <= 1024 or n_pad % 512 != 0:
        return n_pad, n_pad                      # single tile (small / forced)
    tk = next(t for t in (2048, 1024, 512) if n_pad % t == 0)
    return 512, tk                               # >=2 row tiles for v7x 2-TC


def _h_fits_resident(n_pad, tm, tk, budget):
    """Conservative VMEM-use estimate for keeping the full H resident."""
    a_bufs = 3 * tm * tk * 2                     # up to triple-buffered bf16 A
    h_res = 2 * n_pad * LANE * 2                 # resident bf16 H (2 buffers)
    acc = tm * LANE * 4
    out_b = 2 * tm * LANE * 4
    wts = 2 * 2 * LANE * LANE * 2 + 4 * LANE * 4
    return a_bufs + h_res + acc + out_b + wts <= budget


def _a_block_spec(tm, tk, k_steps):
    """A-tile spec; deeper pipelining on the dominant HBM stream if supported."""
    index_map = lambda i, k: (i, k)
    if k_steps >= 3:
        try:
            return pl.BlockSpec((tm, tk), index_map,
                                pipeline_mode=pl.Buffered(3))
        except Exception:
            pass
    return pl.BlockSpec((tm, tk), index_map)


# ----------------------------------------------------------------------------
# Pallas kernels
# ----------------------------------------------------------------------------
def gcn_fused_kernel(a_ref, x_ref, w1_ref, b1_ref, w2_ref, b2_ref,
                     w3_ref, b3_ref, w4_ref, b4_ref, wl_ref, bl_ref, o_ref):
    """Whole network in one kernel (A and H resident in VMEM).

    For each layer:  H <- relu((A @ H) @ W + b)   (bf16 operands, f32 acc);
    the classifier Linear runs on the final H.
    """
    h = x_ref[...]
    for w_ref, b_ref in ((w1_ref, b1_ref), (w2_ref, b2_ref),
                         (w3_ref, b3_ref), (w4_ref, b4_ref)):
        agg = jnp.dot(a_ref[...], h, preferred_element_type=jnp.float32)
        t = jnp.dot(agg.astype(jnp.bfloat16), w_ref[...],
                    preferred_element_type=jnp.float32) + b_ref[...]
        h = jnp.maximum(t, 0.0).astype(jnp.bfloat16)
    o_ref[...] = (jnp.dot(h, wl_ref[...], preferred_element_type=jnp.float32)
                  + bl_ref[...]).astype(o_ref.dtype)


def _accumulate_a_h(a_ref, h_ref, acc_ref, *, tk, h_resident):
    """Accumulate A_tile @ H_tile into acc_ref; returns the reduction index."""
    k = pl.program_id(1)
    if h_resident:
        start = pl.multiple_of(k * tk, LANE)
        h_blk = h_ref[pl.ds(start, tk), :]
    else:
        h_blk = h_ref[...]
    prod = jnp.dot(a_ref[...], h_blk, preferred_element_type=jnp.float32)

    @pl.when(k == 0)
    def _first():
        acc_ref[...] = prod

    @pl.when(k > 0)
    def _accumulate():
        acc_ref[...] += prod

    return k


def gcn_tiled_kernel(a_ref, h_ref, w_ref, b_ref, o_ref, acc_ref,
                     *, tk, h_resident):
    """One GCN layer, A streamed tile-by-tile:  O = relu((A @ H) @ W + b)."""
    k = _accumulate_a_h(a_ref, h_ref, acc_ref, tk=tk, h_resident=h_resident)

    @pl.when(k == pl.num_programs(1) - 1)
    def _epilogue():
        t = jnp.dot(acc_ref[...].astype(jnp.bfloat16), w_ref[...],
                    preferred_element_type=jnp.float32) + b_ref[...]
        o_ref[...] = jnp.maximum(t, 0.0).astype(o_ref.dtype)


def gcn_tiled_final_kernel(a_ref, h_ref, w_ref, b_ref, wl_ref, bl_ref,
                           o_ref, acc_ref, *, tk, h_resident):
    """Last GCN layer fused with the classifier Linear."""
    k = _accumulate_a_h(a_ref, h_ref, acc_ref, tk=tk, h_resident=h_resident)

    @pl.when(k == pl.num_programs(1) - 1)
    def _epilogue():
        t = jnp.dot(acc_ref[...].astype(jnp.bfloat16), w_ref[...],
                    preferred_element_type=jnp.float32) + b_ref[...]
        t = jnp.maximum(t, 0.0).astype(jnp.bfloat16)
        o_ref[...] = (jnp.dot(t, wl_ref[...],
                              preferred_element_type=jnp.float32)
                      + bl_ref[...]).astype(o_ref.dtype)


# ----------------------------------------------------------------------------
# pallas_call wrappers
# ----------------------------------------------------------------------------
def _forward_fused(a_p, x_p, pparams, vmem_limit):
    """Single pallas_call for the whole network (small graphs)."""
    n_pad = a_p.shape[0]
    operands = [a_p, x_p] + list(pparams)
    in_specs = [pl.BlockSpec(op.shape, lambda i: (0, 0)) for op in operands]
    flops = (4 * (2 * n_pad * n_pad * LANE + 2 * n_pad * LANE * LANE)
             + 2 * n_pad * LANE * LANE)
    bytes_accessed = (n_pad * n_pad * 2 + n_pad * LANE * 2
                      + n_pad * LANE * 4 + 5 * LANE * LANE * 2 + 5 * LANE * 4)
    return pl.pallas_call(
        gcn_fused_kernel,
        out_shape=jax.ShapeDtypeStruct((n_pad, LANE), jnp.float32),
        grid=(1,),
        in_specs=in_specs,
        out_specs=pl.BlockSpec((n_pad, LANE), lambda i: (0, 0)),
        compiler_params=pltpu.CompilerParams(
            dimension_semantics=("arbitrary",),
            vmem_limit_bytes=int(vmem_limit)),
        cost_estimate=pl.CostEstimate(flops=int(flops), transcendentals=0,
                                      bytes_accessed=int(bytes_accessed)),
    )(*operands)


def _run_layer_tiled(a_p, h, w_p, b_p, wl_p, bl_p, *, tm, tk, h_resident,
                     vmem_limit, out_dtype):
    """One tiled GCN-layer pallas_call (optionally fused with the Linear)."""
    n_pad = a_p.shape[0]
    feat = h.shape[1]
    grid = (n_pad // tm, n_pad // tk)
    fused = wl_p is not None

    if h_resident:
        # Constant block index -> H is DMA'd once and stays VMEM-resident.
        h_spec = pl.BlockSpec((n_pad, feat), lambda i, k: (0, 0))
    else:
        h_spec = pl.BlockSpec((tk, feat), lambda i, k: (k, 0))

    in_arrays = [a_p, h, w_p, b_p]
    in_specs = [
        _a_block_spec(tm, tk, grid[1]),                    # A tile (bf16)
        h_spec,                                            # H (resident/k-tile)
        pl.BlockSpec((feat, feat), lambda i, k: (0, 0)),   # W (bf16, resident)
        pl.BlockSpec((1, feat), lambda i, k: (0, 0)),      # b (f32, resident)
    ]
    if fused:
        in_arrays += [wl_p, bl_p]
        in_specs += [
            pl.BlockSpec((feat, feat), lambda i, k: (0, 0)),
            pl.BlockSpec((1, feat), lambda i, k: (0, 0)),
        ]
        kernel = functools.partial(gcn_tiled_final_kernel, tk=tk,
                                   h_resident=h_resident)
    else:
        kernel = functools.partial(gcn_tiled_kernel, tk=tk,
                                   h_resident=h_resident)

    out_bytes = jnp.dtype(out_dtype).itemsize
    h_reads = 1 if h_resident else grid[0]
    flops = (2 * n_pad * n_pad * feat
             + 2 * n_pad * feat * feat * (2 if fused else 1))
    bytes_accessed = (n_pad * n_pad * 2                    # A (bf16)
                      + h_reads * n_pad * feat * 2         # H (bf16)
                      + n_pad * feat * out_bytes           # output
                      + (2 if fused else 1) * feat * feat * 2
                      + (2 if fused else 1) * feat * 4)

    return pl.pallas_call(
        kernel,
        out_shape=jax.ShapeDtypeStruct((n_pad, feat), out_dtype),
        grid_spec=pltpu.PrefetchScalarGridSpec(
            num_scalar_prefetch=0,
            grid=grid,
            in_specs=in_specs,
            out_specs=pl.BlockSpec((tm, feat), lambda i, k: (i, 0)),
            scratch_shapes=[pltpu.VMEM((tm, feat), jnp.float32)],
        ),
        compiler_params=pltpu.CompilerParams(
            dimension_semantics=("parallel", "arbitrary"),
            vmem_limit_bytes=int(vmem_limit),
        ),
        cost_estimate=pl.CostEstimate(flops=int(flops), transcendentals=0,
                                      bytes_accessed=int(bytes_accessed)),
    )(*in_arrays)


def _forward_tiled(a_p, x_p, pparams, vmem_limit):
    (w1, b1, w2, b2, w3, b3, w4, b4, wl, bl) = pparams
    n_pad = a_p.shape[0]
    tm, tk = _tiled_tiles(n_pad)
    h_resident = _h_fits_resident(n_pad, tm, tk, vmem_limit)
    h = x_p
    for wp, bp in ((w1, b1), (w2, b2), (w3, b3)):
        h = _run_layer_tiled(a_p, h, wp, bp, None, None, tm=tm, tk=tk,
                             h_resident=h_resident, vmem_limit=vmem_limit,
                             out_dtype=jnp.bfloat16)
    return _run_layer_tiled(a_p, h, w4, b4, wl, bl, tm=tm, tk=tk,
                            h_resident=h_resident, vmem_limit=vmem_limit,
                            out_dtype=jnp.float32)


# ----------------------------------------------------------------------------
# Public forward + one-time padding (done OUTSIDE the forward, per review)
# ----------------------------------------------------------------------------
def prepare_adjacency(a_hat, n_pad):
    n = a_hat.shape[0]
    return jnp.zeros((n_pad, n_pad), jnp.bfloat16).at[:n, :n].set(
        a_hat.astype(jnp.bfloat16))


def prepare_features(x, n_pad):
    n, f = x.shape
    return jnp.zeros((n_pad, LANE), jnp.bfloat16).at[:n, :f].set(
        x.astype(jnp.bfloat16))


def prepare_params(params):
    def pad_w(w):
        return jnp.zeros((LANE, LANE), jnp.bfloat16).at[
            :w.shape[0], :w.shape[1]].set(w.astype(jnp.bfloat16))

    def pad_b(b):
        return jnp.zeros((1, LANE), jnp.float32).at[
            :, :b.shape[1]].set(b.astype(jnp.float32))

    (w1, b1, w2, b2, w3, b3, w4, b4, wl, bl) = params
    return (pad_w(w1), pad_b(b1), pad_w(w2), pad_b(b2), pad_w(w3), pad_b(b3),
            pad_w(w4), pad_b(b4), pad_w(wl), pad_b(bl))


def gcn_forward(a_p, x_p, padded_params, num_nodes, num_classes, *,
                force_tiled=False):
    """Full Net.forward on pre-padded inputs; returns (num_nodes, num_classes)."""
    n_pad = a_p.shape[0]
    vmem_limit = _vmem_budget_bytes()
    if n_pad <= SMALL_FUSED_MAX and not force_tiled:
        out = _forward_fused(a_p, x_p, padded_params, vmem_limit)
    else:
        out = _forward_tiled(a_p, x_p, padded_params, vmem_limit)
    return out[:num_nodes, :num_classes]


# ----------------------------------------------------------------------------
# Glue: normalized adjacency, parameter init, pure-JAX reference
# ----------------------------------------------------------------------------
def build_normalized_adjacency(src, dst, num_nodes):
    """Dense GCN normalization: A_hat = D^-1/2 (A + I) D^-1/2 (PyG semantics)."""
    a = jnp.zeros((num_nodes, num_nodes), dtype=jnp.float32)
    a = a.at[dst, src].set(1.0)                        # aggregate at dst from src
    a = a + jnp.eye(num_nodes, dtype=jnp.float32)      # self loops
    deg = jnp.sum(a, axis=1)
    d_inv_sqrt = jnp.where(deg > 0, 1.0 / jnp.sqrt(deg), 0.0)
    return (d_inv_sqrt[:, None] * a) * d_inv_sqrt[None, :]


def init_params(key, num_node_features, num_classes):
    """Glorot-style init for GCNConv weights + zero biases; uniform Linear."""
    sizes = [(num_node_features, 20), (20, 25), (25, 20), (20, 10)]
    params = []
    for (fin, fout) in sizes:
        key, sub = jax.random.split(key)
        limit = jnp.sqrt(6.0 / (fin + fout))
        w = jax.random.uniform(sub, (fin, fout), jnp.float32, -limit, limit)
        b = jnp.zeros((1, fout), jnp.float32)
        params.extend([w, b])
    key, sub_w, sub_b = jax.random.split(key, 3)
    bound = 1.0 / jnp.sqrt(10.0)
    wl = jax.random.uniform(sub_w, (10, num_classes), jnp.float32, -bound, bound)
    bl = jax.random.uniform(sub_b, (1, num_classes), jnp.float32, -bound, bound)
    params.extend([wl, bl])
    return tuple(params)


def reference_forward(a_hat, x, params):
    """Pure-JAX f32 reference of the same math (sanity check)."""
    (w1, b1, w2, b2, w3, b3, w4, b4, wl, bl) = params
    h = x
    for w, b in ((w1, b1), (w2, b2), (w3, b3), (w4, b4)):
        h = jnp.maximum(a_hat @ (h @ w) + b, 0.0)
    return h @ wl + bl


# ----------------------------------------------------------------------------
if __name__ == "__main__":
    key = jax.random.PRNGKey(0)

    num_nodes = 8
    num_node_features = 4
    num_classes = 3

    # Deterministic small graph: a ring with edges in both directions.
    src = jnp.array([0, 1, 2, 3, 4, 5, 6, 7, 1, 2, 3, 4, 5, 6, 7, 0],
                    dtype=jnp.int32)
    dst = jnp.array([1, 2, 3, 4, 5, 6, 7, 0, 0, 1, 2, 3, 4, 5, 6, 7],
                    dtype=jnp.int32)
    a_hat = build_normalized_adjacency(src, dst, num_nodes)

    key, kx, kp = jax.random.split(key, 3)
    x = jax.random.normal(kx, (num_nodes, num_node_features), jnp.float32)
    params = init_params(kp, num_node_features, num_classes)

    # Pre-pad / pre-cast ONCE, outside the forward (per perf review).
    n_pad = padded_size(num_nodes)
    a_p = prepare_adjacency(a_hat, n_pad)
    x_p = prepare_features(x, n_pad)
    pparams = prepare_params(params)

    ref = reference_forward(a_hat, x, params)

    # Small-graph fully-fused path (the one a graph of this size uses).
    out = jax.block_until_ready(
        gcn_forward(a_p, x_p, pparams, num_nodes, num_classes))
    assert out.shape == (num_nodes, num_classes)
    err = jnp.max(jnp.abs(out - ref))
    assert jnp.allclose(out, ref, atol=5e-2, rtol=5e-2), (
        f"fused max abs err {err}")

    # Also exercise the tiled / streamed-A path so both kernels are validated.
    out_t = jax.block_until_ready(
        gcn_forward(a_p, x_p, pparams, num_nodes, num_classes,
                    force_tiled=True))
    err_t = jnp.max(jnp.abs(out_t - ref))
    assert jnp.allclose(out_t, ref, atol=5e-2, rtol=5e-2), (
        f"tiled max abs err {err_t}")

    print("KERNEL_OK")
</pallas_src>

<mosaic_0001>
module attributes {stable_mosaic.version = 11 : i64} {
  func.func @gcn_fused_kernel(%arg0: i32, %arg1: memref<128x128xbf16, #tpu.memory_space<vmem>>, %arg2: memref<128x128xbf16, #tpu.memory_space<vmem>>, %arg3: memref<128x128xbf16, #tpu.memory_space<vmem>>, %arg4: memref<1x128xf32, #tpu.memory_space<vmem>>, %arg5: memref<128x128xbf16, #tpu.memory_space<vmem>>, %arg6: memref<1x128xf32, #tpu.memory_space<vmem>>, %arg7: memref<128x128xbf16, #tpu.memory_space<vmem>>, %arg8: memref<1x128xf32, #tpu.memory_space<vmem>>, %arg9: memref<128x128xbf16, #tpu.memory_space<vmem>>, %arg10: memref<1x128xf32, #tpu.memory_space<vmem>>, %arg11: memref<128x128xbf16, #tpu.memory_space<vmem>>, %arg12: memref<1x128xf32, #tpu.memory_space<vmem>>, %arg13: memref<128x128xf32, #tpu.memory_space<vmem>>) attributes {dimension_semantics = [#tpu.dimension_semantics<arbitrary>], iteration_bounds = array<i64: 1>, scalar_prefetch = 0 : i64, scratch_operands = 0 : i64, tpu.core_type = #tpu.core_type<tc>, window_params = [{pipeline_mode = #tpu.pipeline_mode<synchronous>, transform_indices = @transform_0, window_bounds = array<i64: 128, 128>}, {pipeline_mode = #tpu.pipeline_mode<synchronous>, transform_indices = @transform_1, window_bounds = array<i64: 128, 128>}, {pipeline_mode = #tpu.pipeline_mode<synchronous>, transform_indices = @transform_2, window_bounds = array<i64: 128, 128>}, {pipeline_mode = #tpu.pipeline_mode<synchronous>, transform_indices = @transform_3, window_bounds = array<i64: 1, 128>}, {pipeline_mode = #tpu.pipeline_mode<synchronous>, transform_indices = @transform_4, window_bounds = array<i64: 128, 128>}, {pipeline_mode = #tpu.pipeline_mode<synchronous>, transform_indices = @transform_5, window_bounds = array<i64: 1, 128>}, {pipeline_mode = #tpu.pipeline_mode<synchronous>, transform_indices = @transform_6, window_bounds = array<i64: 128, 128>}, {pipeline_mode = #tpu.pipeline_mode<synchronous>, transform_indices = @transform_7, window_bounds = array<i64: 1, 128>}, {pipeline_mode = #tpu.pipeline_mode<synchronous>, transform_indices = @transform_8, window_bounds = array<i64: 128, 128>}, {pipeline_mode = #tpu.pipeline_mode<synchronous>, transform_indices = @transform_9, window_bounds = array<i64: 1, 128>}, {pipeline_mode = #tpu.pipeline_mode<synchronous>, transform_indices = @transform_10, window_bounds = array<i64: 128, 128>}, {pipeline_mode = #tpu.pipeline_mode<synchronous>, transform_indices = @transform_11, window_bounds = array<i64: 1, 128>}, {pipeline_mode = #tpu.pipeline_mode<synchronous>, transform_indices = @transform_12, window_bounds = array<i64: 128, 128>}]} {
    %c0 = arith.constant 0 : index
    %c0_0 = arith.constant 0 : index
    %0 = vector.load %arg2[%c0, %c0_0] : memref<128x128xbf16, #tpu.memory_space<vmem>>, vector<128x128xbf16>
    %c0_1 = arith.constant 0 : index
    %c0_2 = arith.constant 0 : index
    %1 = vector.load %arg1[%c0_1, %c0_2] : memref<128x128xbf16, #tpu.memory_space<vmem>>, vector<128x128xbf16>
    %cst = arith.constant dense<0.000000e+00> : vector<128x128xf32>
    %2 = tpu.matmul %1, %0, %cst {dimension_numbers = #tpu.dot_dimension_numbers<[1], [0], [0], [1], [0, 0, 1, 1], [], []>} : vector<128x128xbf16>, vector<128x128xbf16>, vector<128x128xf32> -> vector<128x128xf32>
    %3 = arith.truncf %2 : vector<128x128xf32> to vector<128x128xbf16>
    %c0_3 = arith.constant 0 : index
    %c0_4 = arith.constant 0 : index
    %4 = vector.load %arg3[%c0_3, %c0_4] : memref<128x128xbf16, #tpu.memory_space<vmem>>, vector<128x128xbf16>
    %cst_5 = arith.constant dense<0.000000e+00> : vector<128x128xf32>
    %5 = tpu.matmul %3, %4, %cst_5 {dimension_numbers = #tpu.dot_dimension_numbers<[1], [0], [0], [1], [0, 0, 1, 1], [], []>} : vector<128x128xbf16>, vector<128x128xbf16>, vector<128x128xf32> -> vector<128x128xf32>
    %c0_6 = arith.constant 0 : index
    %c0_7 = arith.constant 0 : index
    %6 = vector.load %arg4[%c0_6, %c0_7] : memref<1x128xf32, #tpu.memory_space<vmem>>, vector<1x128xf32>
    %7 = vector.broadcast %6 : vector<1x128xf32> to vector<128x128xf32>
    %8 = arith.addf %5, %7 : vector<128x128xf32>
    %cst_8 = arith.constant 0.000000e+00 : f32
    %9 = vector.broadcast %cst_8 : f32 to vector<128x128xf32>
    %10 = arith.maximumf %8, %9 : vector<128x128xf32>
    %11 = arith.truncf %10 : vector<128x128xf32> to vector<128x128xbf16>
    %c0_9 = arith.constant 0 : index
    %c0_10 = arith.constant 0 : index
    %12 = vector.load %arg1[%c0_9, %c0_10] : memref<128x128xbf16, #tpu.memory_space<vmem>>, vector<128x128xbf16>
    %cst_11 = arith.constant dense<0.000000e+00> : vector<128x128xf32>
    %13 = tpu.matmul %12, %11, %cst_11 {dimension_numbers = #tpu.dot_dimension_numbers<[1], [0], [0], [1], [0, 0, 1, 1], [], []>} : vector<128x128xbf16>, vector<128x128xbf16>, vector<128x128xf32> -> vector<128x128xf32>
    %14 = arith.truncf %13 : vector<128x128xf32> to vector<128x128xbf16>
    %c0_12 = arith.constant 0 : index
    %c0_13 = arith.constant 0 : index
    %15 = vector.load %arg5[%c0_12, %c0_13] : memref<128x128xbf16, #tpu.memory_space<vmem>>, vector<128x128xbf16>
    %cst_14 = arith.constant dense<0.000000e+00> : vector<128x128xf32>
    %16 = tpu.matmul %14, %15, %cst_14 {dimension_numbers = #tpu.dot_dimension_numbers<[1], [0], [0], [1], [0, 0, 1, 1], [], []>} : vector<128x128xbf16>, vector<128x128xbf16>, vector<128x128xf32> -> vector<128x128xf32>
    %c0_15 = arith.constant 0 : index
    %c0_16 = arith.constant 0 : index
    %17 = vector.load %arg6[%c0_15, %c0_16] : memref<1x128xf32, #tpu.memory_space<vmem>>, vector<1x128xf32>
    %18 = vector.broadcast %17 : vector<1x128xf32> to vector<128x128xf32>
    %19 = arith.addf %16, %18 : vector<128x128xf32>
    %cst_17 = arith.constant 0.000000e+00 : f32
    %20 = vector.broadcast %cst_17 : f32 to vector<128x128xf32>
    %21 = arith.maximumf %19, %20 : vector<128x128xf32>
    %22 = arith.truncf %21 : vector<128x128xf32> to vector<128x128xbf16>
    %c0_18 = arith.constant 0 : index
    %c0_19 = arith.constant 0 : index
    %23 = vector.load %arg1[%c0_18, %c0_19] : memref<128x128xbf16, #tpu.memory_space<vmem>>, vector<128x128xbf16>
    %cst_20 = arith.constant dense<0.000000e+00> : vector<128x128xf32>
    %24 = tpu.matmul %23, %22, %cst_20 {dimension_numbers = #tpu.dot_dimension_numbers<[1], [0], [0], [1], [0, 0, 1, 1], [], []>} : vector<128x128xbf16>, vector<128x128xbf16>, vector<128x128xf32> -> vector<128x128xf32>
    %25 = arith.truncf %24 : vector<128x128xf32> to vector<128x128xbf16>
    %c0_21 = arith.constant 0 : index
    %c0_22 = arith.constant 0 : index
    %26 = vector.load %arg7[%c0_21, %c0_22] : memref<128x128xbf16, #tpu.memory_space<vmem>>, vector<128x128xbf16>
    %cst_23 = arith.constant dense<0.000000e+00> : vector<128x128xf32>
    %27 = tpu.matmul %25, %26, %cst_23 {dimension_numbers = #tpu.dot_dimension_numbers<[1], [0], [0], [1], [0, 0, 1, 1], [], []>} : vector<128x128xbf16>, vector<128x128xbf16>, vector<128x128xf32> -> vector<128x128xf32>
    %c0_24 = arith.constant 0 : index
    %c0_25 = arith.constant 0 : index
    %28 = vector.load %arg8[%c0_24, %c0_25] : memref<1x128xf32, #tpu.memory_space<vmem>>, vector<1x128xf32>
    %29 = vector.broadcast %28 : vector<1x128xf32> to vector<128x128xf32>
    %30 = arith.addf %27, %29 : vector<128x128xf32>
    %cst_26 = arith.constant 0.000000e+00 : f32
    %31 = vector.broadcast %cst_26 : f32 to vector<128x128xf32>
    %32 = arith.maximumf %30, %31 : vector<128x128xf32>
    %33 = arith.truncf %32 : vector<128x128xf32> to vector<128x128xbf16>
    %c0_27 = arith.constant 0 : index
    %c0_28 = arith.constant 0 : index
    %34 = vector.load %arg1[%c0_27, %c0_28] : memref<128x128xbf16, #tpu.memory_space<vmem>>, vector<128x128xbf16>
    %cst_29 = arith.constant dense<0.000000e+00> : vector<128x128xf32>
    %35 = tpu.matmul %34, %33, %cst_29 {dimension_numbers = #tpu.dot_dimension_numbers<[1], [0], [0], [1], [0, 0, 1, 1], [], []>} : vector<128x128xbf16>, vector<128x128xbf16>, vector<128x128xf32> -> vector<128x128xf32>
    %36 = arith.truncf %35 : vector<128x128xf32> to vector<128x128xbf16>
    %c0_30 = arith.constant 0 : index
    %c0_31 = arith.constant 0 : index
    %37 = vector.load %arg9[%c0_30, %c0_31] : memref<128x128xbf16, #tpu.memory_space<vmem>>, vector<128x128xbf16>
    %cst_32 = arith.constant dense<0.000000e+00> : vector<128x128xf32>
    %38 = tpu.matmul %36, %37, %cst_32 {dimension_numbers = #tpu.dot_dimension_numbers<[1], [0], [0], [1], [0, 0, 1, 1], [], []>} : vector<128x128xbf16>, vector<128x128xbf16>, vector<128x128xf32> -> vector<128x128xf32>
    %c0_33 = arith.constant 0 : index
    %c0_34 = arith.constant 0 : index
    %39 = vector.load %arg10[%c0_33, %c0_34] : memref<1x128xf32, #tpu.memory_space<vmem>>, vector<1x128xf32>
    %40 = vector.broadcast %39 : vector<1x128xf32> to vector<128x128xf32>
    %41 = arith.addf %38, %40 : vector<128x128xf32>
    %cst_35 = arith.constant 0.000000e+00 : f32
    %42 = vector.broadcast %cst_35 : f32 to vector<128x128xf32>
    %43 = arith.maximumf %41, %42 : vector<128x128xf32>
    %44 = arith.truncf %43 : vector<128x128xf32> to vector<128x128xbf16>
    %c0_36 = arith.constant 0 : index
    %c0_37 = arith.constant 0 : index
    %45 = vector.load %arg11[%c0_36, %c0_37] : memref<128x128xbf16, #tpu.memory_space<vmem>>, vector<128x128xbf16>
    %cst_38 = arith.constant dense<0.000000e+00> : vector<128x128xf32>
    %46 = tpu.matmul %44, %45, %cst_38 {dimension_numbers = #tpu.dot_dimension_numbers<[1], [0], [0], [1], [0, 0, 1, 1], [], []>} : vector<128x128xbf16>, vector<128x128xbf16>, vector<128x128xf32> -> vector<128x128xf32>
    %c0_39 = arith.constant 0 : index
    %c0_40 = arith.constant 0 : index
    %47 = vector.load %arg12[%c0_39, %c0_40] : memref<1x128xf32, #tpu.memory_space<vmem>>, vector<1x128xf32>
    %48 = vector.broadcast %47 : vector<1x128xf32> to vector<128x128xf32>
    %49 = arith.addf %46, %48 : vector<128x128xf32>
    %c0_41 = arith.constant 0 : index
    %c0_42 = arith.constant 0 : index
    %50 = vector.load %arg13[%c0_41, %c0_42] : memref<128x128xf32, #tpu.memory_space<vmem>>, vector<128x128xf32>
    tpu.vector_store %arg13[%c0_41, %c0_42], %49 {strides = array<i32>} : memref<128x128xf32, #tpu.memory_space<vmem>>, vector<128x128xf32>,
    return
  }
  func.func @transform_0(%arg0: i32) -> (i32, i32) {
    %c0_i32 = arith.constant 0 : i32
    %c0_i32_0 = arith.constant 0 : i32
    %c0_i32_1 = arith.constant 0 : i32
    return %c0_i32, %c0_i32_0 : i32, i32
  }
  func.func @transform_1(%arg0: i32) -> (i32, i32) {
    %c0_i32 = arith.constant 0 : i32
    %c0_i32_0 = arith.constant 0 : i32
    %c0_i32_1 = arith.constant 0 : i32
    return %c0_i32, %c0_i32_0 : i32, i32
  }
  func.func @transform_2(%arg0: i32) -> (i32, i32) {
    %c0_i32 = arith.constant 0 : i32
    %c0_i32_0 = arith.constant 0 : i32
    %c0_i32_1 = arith.constant 0 : i32
    return %c0_i32, %c0_i32_0 : i32, i32
  }
  func.func @transform_3(%arg0: i32) -> (i32, i32) {
    %c0_i32 = arith.constant 0 : i32
    %c0_i32_0 = arith.constant 0 : i32
    %c0_i32_1 = arith.constant 0 : i32
    return %c0_i32, %c0_i32_0 : i32, i32
  }
  func.func @transform_4(%arg0: i32) -> (i32, i32) {
    %c0_i32 = arith.constant 0 : i32
    %c0_i32_0 = arith.constant 0 : i32
    %c0_i32_1 = arith.constant 0 : i32
    return %c0_i32, %c0_i32_0 : i32, i32
  }
  func.func @transform_5(%arg0: i32) -> (i32, i32) {
    %c0_i32 = arith.constant 0 : i32
    %c0_i32_0 = arith.constant 0 : i32
    %c0_i32_1 = arith.constant 0 : i32
    return %c0_i32, %c0_i32_0 : i32, i32
  }
  func.func @transform_6(%arg0: i32) -> (i32, i32) {
    %c0_i32 = arith.constant 0 : i32
    %c0_i32_0 = arith.constant 0 : i32
    %c0_i32_1 = arith.constant 0 : i32
    return %c0_i32, %c0_i32_0 : i32, i32
  }
  func.func @transform_7(%arg0: i32) -> (i32, i32) {
    %c0_i32 = arith.constant 0 : i32
    %c0_i32_0 = arith.constant 0 : i32
    %c0_i32_1 = arith.constant 0 : i32
    return %c0_i32, %c0_i32_0 : i32, i32
  }
  func.func @transform_8(%arg0: i32) -> (i32, i32) {
    %c0_i32 = arith.constant 0 : i32
    %c0_i32_0 = arith.constant 0 : i32
    %c0_i32_1 = arith.constant 0 : i32
    return %c0_i32, %c0_i32_0 : i32, i32
  }
  func.func @transform_9(%arg0: i32) -> (i32, i32) {
    %c0_i32 = arith.constant 0 : i32
    %c0_i32_0 = arith.constant 0 : i32
    %c0_i32_1 = arith.constant 0 : i32
    return %c0_i32, %c0_i32_0 : i32, i32
  }
  func.func @transform_10(%arg0: i32) -> (i32, i32) {
    %c0_i32 = arith.constant 0 : i32
    %c0_i32_0 = arith.constant 0 : i32
    %c0_i32_1 = arith.constant 0 : i32
    return %c0_i32, %c0_i32_0 : i32, i32
  }
  func.func @transform_11(%arg0: i32) -> (i32, i32) {
    %c0_i32 = arith.constant 0 : i32
    %c0_i32_0 = arith.constant 0 : i32
    %c0_i32_1 = arith.constant 0 : i32
    return %c0_i32, %c0_i32_0 : i32, i32
  }
  func.func @transform_12(%arg0: i32) -> (i32, i32) {
    %c0_i32 = arith.constant 0 : i32
    %c0_i32_0 = arith.constant 0 : i32
    %c0_i32_1 = arith.constant 0 : i32
    return %c0_i32, %c0_i32_0 : i32, i32
  }
}

</mosaic_0001>

<llo_original>
// kernel: tpu_custom_call.1
$region0: #{tpu_custom_call.1}
  #allocation0 [shape = 'u32[]', space=smem, size = 0x4, offset = 0x4, fixed_abs, tag = 'smem constant byte address 0x4 - core index']
  #allocation1 [shape = 'u32[72,128]{1,0:T(1,128)}', space=vmem, size = 0x9000, scoped, tag = 'internal scratch']
  %s0 = inlined_call_operand.hbm [shape: bf16[128,128], index: 0, kind: input, shape index: {}]
  %s1 = inlined_call_operand.hbm [shape: bf16[128,128], index: 1, kind: input, shape index: {}]
  %s2 = inlined_call_operand.hbm [shape: bf16[128,128], index: 2, kind: input, shape index: {}]
  %s3 = inlined_call_operand.vmem [shape: f32[1,128], index: 3, kind: input, shape index: {}]
  %s4 = inlined_call_operand.hbm [shape: bf16[128,128], index: 4, kind: input, shape index: {}]
  %s5 = inlined_call_operand.vmem [shape: f32[1,128], index: 5, kind: input, shape index: {}]
  %s6 = inlined_call_operand.hbm [shape: bf16[128,128], index: 6, kind: input, shape index: {}]
  %s7 = inlined_call_operand.vmem [shape: f32[1,128], index: 7, kind: input, shape index: {}]
  %s8 = inlined_call_operand.hbm [shape: bf16[128,128], index: 8, kind: input, shape index: {}]
  %s9 = inlined_call_operand.vmem [shape: f32[1,128], index: 9, kind: input, shape index: {}]
  %s10 = inlined_call_operand.hbm [shape: bf16[128,128], index: 10, kind: input, shape index: {}]
  %s11 = inlined_call_operand.vmem [shape: f32[1,128], index: 11, kind: input, shape index: {}]
  %s12 = inlined_call_operand.hbm [shape: f32[128,128], index: 12, kind: output, shape index: {}]
  %s13 = sld [smem:[#allocation0]]
  $region86: #{tpu_custom_call.1} parent=0
    _
  %s15 = ssub.s32 1, %s13
  %s16 = scalar_select 0, %s15, %s13
  $region1: #{tpu_custom_call.1} parent=0
    #allocation2 [shape = 'u8[32768]{0}', space=vmem, size = 0x8000, scoped, tag = 'input window, operand 0, single buffered']
    #allocation3 [shape = 's32[1]{0}', space=sflag, size = 0x4, scoped, tag = 'scoped memory for tpu_custom_call.1']
    #allocation4 [shape = 's32[1]{0}', space=sflag, size = 0x4, scoped, tag = 'scoped memory for tpu_custom_call.1']
    #allocation5 [shape = 'u8[32768]{0}', space=vmem, size = 0x8000, scoped, tag = 'input window, operand 1, single buffered']
    #allocation6 [shape = 's32[1]{0}', space=sflag, size = 0x4, scoped, tag = 'scoped memory for tpu_custom_call.1']
    #allocation7 [shape = 'u8[32768]{0}', space=vmem, size = 0x8000, scoped, tag = 'input window, operand 2, single buffered']
    #allocation8 [shape = 'u8[32768]{0}', space=vmem, size = 0x8000, scoped, tag = 'input window, operand 4, single buffered']
    #allocation9 [shape = 's32[1]{0}', space=sflag, size = 0x4, scoped, tag = 'scoped memory for tpu_custom_call.1']
    #allocation10 [shape = 'u8[32768]{0}', space=vmem, size = 0x8000, scoped, tag = 'input window, operand 6, single buffered']
    #allocation11 [shape = 'u8[32768]{0}', space=vmem, size = 0x8000, scoped, tag = 'input window, operand 8, single buffered']
    #allocation12 [shape = 's32[1]{0}', space=sflag, size = 0x4, scoped, tag = 'scoped memory for tpu_custom_call.1']
    #allocation13 [shape = 'u8[32768]{0}', space=vmem, size = 0x8000, scoped, tag = 'input window, operand 10, single buffered']
    #allocation14 [shape = 'u8[65536]{0}', space=vmem, size = 0x10000, scoped, tag = 'output window, operand 0, single buffered']
    %17 = vsyncpa [#allocation3], 0
    %18 = vsyncpa [#allocation6], 0
    %19 = vsyncpa [#allocation9], 0
    %20 = vsyncpa [#allocation12], 0
    %21 = vsyncpa [#allocation4], 0
    // Predicated region
    $region2: #{tpu_custom_call.1} parent=1 // pred_check
      _
    $region3: #{tpu_custom_call.1} parent=1 // pred_check_branch
      %23 = sbr.rel (0) target = $region5
    $region4: #{tpu_custom_call.1} parent=1 // pred_region
      %25 = vsyncadd [#allocation3], 0
      %s26 = sshll.u32 %s0, 4
      %s27 = int_to_ptr.hbm [resolvable:$true] %s26
      %s28 = sshll.u32 [#allocation2], 4
      %s29 = int_to_ptr.vmem [resolvable:$true] %s28
      %34 = dma.hbm_to_vmem [thread:$0]  %s27, 1024, %s29, [#allocation3], 64, 64, 4
    $region5: #{tpu_custom_call.1} parent=1 // pred_fallthru
      _
    // Predicated region
    $region6: #{tpu_custom_call.1} parent=1 // pred_check
      _
    $region7: #{tpu_custom_call.1} parent=1 // pred_check_branch
      %36 = sbr.rel (0) target = $region9
    $region8: #{tpu_custom_call.1} parent=1 // pred_region
      %38 = vsyncadd [#allocation6], 0
      %s39 = sshll.u32 %s1, 4
      %s40 = int_to_ptr.hbm [resolvable:$true] %s39
      %s41 = sshll.u32 [#allocation5], 4
      %s42 = int_to_ptr.vmem [resolvable:$true] %s41
      %47 = dma.hbm_to_vmem [thread:$0]  %s40, 1024, %s42, [#allocation6], 64, 64, 4
    $region9: #{tpu_custom_call.1} parent=1 // pred_fallthru
      _
    // Predicated region
    $region10: #{tpu_custom_call.1} parent=1 // pred_check
      _
    $region11: #{tpu_custom_call.1} parent=1 // pred_check_branch
      %49 = sbr.rel (0) target = $region13
    $region12: #{tpu_custom_call.1} parent=1 // pred_region
      %51 = vsyncadd [#allocation6], 0
      %s52 = sshll.u32 %s2, 4
      %s53 = int_to_ptr.hbm [resolvable:$true] %s52
      %s54 = sshll.u32 [#allocation7], 4
      %s55 = int_to_ptr.vmem [resolvable:$true] %s54
      %60 = dma.hbm_to_vmem [thread:$0]  %s53, 1024, %s55, [#allocation6], 64, 64, 4
    $region13: #{tpu_custom_call.1} parent=1 // pred_fallthru
      _
    // Predicated region
    $region14: #{tpu_custom_call.1} parent=1 // pred_check
      _
    $region15: #{tpu_custom_call.1} parent=1 // pred_check_branch
      %62 = sbr.rel (0) target = $region17
    $region16: #{tpu_custom_call.1} parent=1 // pred_region
      _
    $region17: #{tpu_custom_call.1} parent=1 // pred_fallthru
      _
    // Predicated region
    $region18: #{tpu_custom_call.1} parent=1 // pred_check
      _
    $region19: #{tpu_custom_call.1} parent=1 // pred_check_branch
      %64 = sbr.rel (0) target = $region21
    $region20: #{tpu_custom_call.1} parent=1 // pred_region
      %66 = vsyncadd [#allocation9], 0
      %s67 = sshll.u32 %s4, 4
      %s68 = int_to_ptr.hbm [resolvable:$true] %s67
      %s69 = sshll.u32 [#allocation8], 4
      %s70 = int_to_ptr.vmem [resolvable:$true] %s69
      %75 = dma.hbm_to_vmem [thread:$0]  %s68, 1024, %s70, [#allocation9], 64, 64, 4
    $region21: #{tpu_custom_call.1} parent=1 // pred_fallthru
      _
    // Predicated region
    $region22: #{tpu_custom_call.1} parent=1 // pred_check
      _
    $region23: #{tpu_custom_call.1} parent=1 // pred_check_branch
      %77 = sbr.rel (0) target = $region25
    $region24: #{tpu_custom_call.1} parent=1 // pred_region
      _
    $region25: #{tpu_custom_call.1} parent=1 // pred_fallthru
      _
    // Predicated region
    $region26: #{tpu_custom_call.1} parent=1 // pred_check
      _
    $region27: #{tpu_custom_call.1} parent=1 // pred_check_branch
      %79 = sbr.rel (0) target = $region29
    $region28: #{tpu_custom_call.1} parent=1 // pred_region
      %81 = vsyncadd [#allocation9], 0
      %s82 = sshll.u32 %s6, 4
      %s83 = int_to_ptr.hbm [resolvable:$true] %s82
      %s84 = sshll.u32 [#allocation10], 4
      %s85 = int_to_ptr.vmem [resolvable:$true] %s84
      %90 = dma.hbm_to_vmem [thread:$0]  %s83, 1024, %s85, [#allocation9], 64, 64, 4
    $region29: #{tpu_custom_call.1} parent=1 // pred_fallthru
      _
    // Predicated region
    $region30: #{tpu_custom_call.1} parent=1 // pred_check
      _
    $region31: #{tpu_custom_call.1} parent=1 // pred_check_branch
      %92 = sbr.rel (0) target = $region33
    $region32: #{tpu_custom_call.1} parent=1 // pred_region
      _
    $region33: #{tpu_custom_call.1} parent=1 // pred_fallthru
      _
    // Predicated region
    $region34: #{tpu_custom_call.1} parent=1 // pred_check
      _
    $region35: #{tpu_custom_call.1} parent=1 // pred_check_branch
      %94 = sbr.rel (0) target = $region37
    $region36: #{tpu_custom_call.1} parent=1 // pred_region
      %96 = vsyncadd [#allocation12], 0
      %s97 = sshll.u32 %s8, 4
      %s98 = int_to_ptr.hbm [resolvable:$true] %s97
      %s99 = sshll.u32 [#allocation11], 4
      %s100 = int_to_ptr.vmem [resolvable:$true] %s99
      %105 = dma.hbm_to_vmem [thread:$0]  %s98, 1024, %s100, [#allocation12], 64, 64, 4
    $region37: #{tpu_custom_call.1} parent=1 // pred_fallthru
      _
    // Predicated region
    $region38: #{tpu_custom_call.1} parent=1 // pred_check
      _
    $region39: #{tpu_custom_call.1} parent=1 // pred_check_branch
      %107 = sbr.rel (0) target = $region41
    $region40: #{tpu_custom_call.1} parent=1 // pred_region
      _
    $region41: #{tpu_custom_call.1} parent=1 // pred_fallthru
      _
    // Predicated region
    $region42: #{tpu_custom_call.1} parent=1 // pred_check
      _
    $region43: #{tpu_custom_call.1} parent=1 // pred_check_branch
      %109 = sbr.rel (0) target = $region45
    $region44: #{tpu_custom_call.1} parent=1 // pred_region
      %111 = vsyncadd [#allocation12], 0
      %s112 = sshll.u32 %s10, 4
      %s113 = int_to_ptr.hbm [resolvable:$true] %s112
      %s114 = sshll.u32 [#allocation13], 4
      %s115 = int_to_ptr.vmem [resolvable:$true] %s114
      %120 = dma.hbm_to_vmem [thread:$0]  %s113, 1024, %s115, [#allocation12], 64, 64, 4
    $region45: #{tpu_custom_call.1} parent=1 // pred_fallthru
      _
    // Predicated region
    $region46: #{tpu_custom_call.1} parent=1 // pred_check
      _
    $region47: #{tpu_custom_call.1} parent=1 // pred_check_branch
      %122 = sbr.rel (0) target = $region49
    $region48: #{tpu_custom_call.1} parent=1 // pred_region
      _
    $region49: #{tpu_custom_call.1} parent=1 // pred_fallthru
      _
    // Predicated region
    $region50: #{tpu_custom_call.1} parent=1 // pred_check
      _
    $region51: #{tpu_custom_call.1} parent=1 // pred_check_branch
      %124 = sbr.rel (0) target = $region53
    $region52: #{tpu_custom_call.1} parent=1 // pred_region
      %126 = dma.done [#allocation3], 1024
    $region53: #{tpu_custom_call.1} parent=1 // pred_fallthru
      _
    // Predicated region
    $region54: #{tpu_custom_call.1} parent=1 // pred_check
      _
    $region55: #{tpu_custom_call.1} parent=1 // pred_check_branch
      %128 = sbr.rel (0) target = $region57
    $region56: #{tpu_custom_call.1} parent=1 // pred_region
      %130 = dma.done [#allocation6], 1024
    $region57: #{tpu_custom_call.1} parent=1 // pred_fallthru
      _
    // Predicated region
    $region58: #{tpu_custom_call.1} parent=1 // pred_check
      _
    $region59: #{tpu_custom_call.1} parent=1 // pred_check_branch
      %132 = sbr.rel (0) target = $region61
    $region60: #{tpu_custom_call.1} parent=1 // pred_region
      %134 = dma.done [#allocation6], 1024
    $region61: #{tpu_custom_call.1} parent=1 // pred_fallthru
      _
    // Predicated region
    $region62: #{tpu_custom_call.1} parent=1 // pred_check
      _
    $region63: #{tpu_custom_call.1} parent=1 // pred_check_branch
      %136 = sbr.rel (0) target = $region65
    $region64: #{tpu_custom_call.1} parent=1 // pred_region
      %138 = dma.done [#allocation9], 1024
    $region65: #{tpu_custom_call.1} parent=1 // pred_fallthru
      _
    // Predicated region
    $region66: #{tpu_custom_call.1} parent=1 // pred_check
      _
    $region67: #{tpu_custom_call.1} parent=1 // pred_check_branch
      %140 = sbr.rel (0) target = $region69
    $region68: #{tpu_custom_call.1} parent=1 // pred_region
      %142 = dma.done [#allocation9], 1024
    $region69: #{tpu_custom_call.1} parent=1 // pred_fallthru
      _
    // Predicated region
    $region70: #{tpu_custom_call.1} parent=1 // pred_check
      _
    $region71: #{tpu_custom_call.1} parent=1 // pred_check_branch
      %144 = sbr.rel (0) target = $region73
    $region72: #{tpu_custom_call.1} parent=1 // pred_region
      %146 = dma.done [#allocation12], 1024
    $region73: #{tpu_custom_call.1} parent=1 // pred_fallthru
      _
    // Predicated region
    $region74: #{tpu_custom_call.1} parent=1 // pred_check
      _
    $region75: #{tpu_custom_call.1} parent=1 // pred_check_branch
      %148 = sbr.rel (0) target = $region77
    $region76: #{tpu_custom_call.1} parent=1 // pred_region
      %150 = dma.done [#allocation12], 1024
    $region77: #{tpu_custom_call.1} parent=1 // pred_fallthru
      _
    %v151 = vld [vmem:[#allocation5] sm:$0xf]
    %v152 = vld [vmem:[#allocation5 + $0x4] sm:$0xf]
    %v153 = vld [vmem:[#allocation5 + $0x8] sm:$0xf]
    %v154 = vld [vmem:[#allocation5 + $0xc] sm:$0xf]
    %v155 = vld [vmem:[#allocation5 + $0x10] sm:$0xf]
    %v156 = vld [vmem:[#allocation5 + $0x14] sm:$0xf]
    %v157 = vld [vmem:[#allocation5 + $0x18] sm:$0xf]
    %v158 = vld [vmem:[#allocation5 + $0x1c] sm:$0xf]
    %v159 = vld [vmem:[#allocation5 + $0x20] sm:$0xf]
    %v160 = vld [vmem:[#allocation5 + $0x24] sm:$0xf]
    %v161 = vld [vmem:[#allocation5 + $0x28] sm:$0xf]
    %v162 = vld [vmem:[#allocation5 + $0x2c] sm:$0xf]
    %v163 = vld [vmem:[#allocation5 + $0x30] sm:$0xf]
    %v164 = vld [vmem:[#allocation5 + $0x34] sm:$0xf]
    %v165 = vld [vmem:[#allocation5 + $0x38] sm:$0xf]
    %v166 = vld [vmem:[#allocation5 + $0x3c] sm:$0xf]
    %v167 = vld [vmem:[#allocation2] sm:$0xf]
    %v168 = vld [vmem:[#allocation2 + $0x4] sm:$0xf]
    %v169 = vld [vmem:[#allocation2 + $0x8] sm:$0xf]
    %v170 = vld [vmem:[#allocation2 + $0xc] sm:$0xf]
    %v171 = vld [vmem:[#allocation2 + $0x10] sm:$0xf]
    %v172 = vld [vmem:[#allocation2 + $0x14] sm:$0xf]
    %v173 = vld [vmem:[#allocation2 + $0x18] sm:$0xf]
    %v174 = vld [vmem:[#allocation2 + $0x1c] sm:$0xf]
    %v175 = vld [vmem:[#allocation2 + $0x20] sm:$0xf]
    %v176 = vld [vmem:[#allocation2 + $0x24] sm:$0xf]
    %v177 = vld [vmem:[#allocation2 + $0x28] sm:$0xf]
    %v178 = vld [vmem:[#allocation2 + $0x2c] sm:$0xf]
    %v179 = vld [vmem:[#allocation2 + $0x30] sm:$0xf]
    %v180 = vld [vmem:[#allocation2 + $0x34] sm:$0xf]
    %v181 = vld [vmem:[#allocation2 + $0x38] sm:$0xf]
    %v182 = vld [vmem:[#allocation2 + $0x3c] sm:$0xf]
    %v199 = vunpack.c.l.b16 %v167
    %v200 = vunpack.c.l.b16 %v168
    %v201 = vunpack.c.l.b16 %v169
    %v202 = vunpack.c.l.b16 %v170
    %v203 = vunpack.c.l.b16 %v171
    %v204 = vunpack.c.l.b16 %v172
    %v205 = vunpack.c.l.b16 %v173
    %v206 = vunpack.c.l.b16 %v174
    %v207 = vunpack.c.l.b16 %v175
    %v208 = vunpack.c.l.b16 %v176
    %v209 = vunpack.c.l.b16 %v177
    %v210 = vunpack.c.l.b16 %v178
    %v211 = vunpack.c.l.b16 %v179
    %v212 = vunpack.c.l.b16 %v180
    %v213 = vunpack.c.l.b16 %v181
    %v214 = vunpack.c.l.b16 %v182
    %v215 = vpack.c.b16 %v200, %v199
    %v216 = vpack.c.b16 %v202, %v201
    %v217 = vpack.c.b16 %v204, %v203
    %v218 = vpack.c.b16 %v206, %v205
    %v219 = vpack.c.b16 %v208, %v207
    %v220 = vpack.c.b16 %v210, %v209
    %v221 = vpack.c.b16 %v212, %v211
    %v222 = vpack.c.b16 %v214, %v213
    %v247 = vunpack.c.l.b16 %v151
    %v248 = vunpack.c.l.b16 %v152
    %v249 = vunpack.c.l.b16 %v153
    %v250 = vunpack.c.l.b16 %v154
    %v251 = vunpack.c.l.b16 %v155
    %v252 = vunpack.c.l.b16 %v156
    %v253 = vunpack.c.l.b16 %v157
    %v254 = vunpack.c.l.b16 %v158
    %v255 = vunpack.c.l.b16 %v159
    %v256 = vunpack.c.l.b16 %v160
    %v257 = vunpack.c.l.b16 %v161
    %v258 = vunpack.c.l.b16 %v162
    %v259 = vunpack.c.l.b16 %v163
    %v260 = vunpack.c.l.b16 %v164
    %v261 = vunpack.c.l.b16 %v165
    %v262 = vunpack.c.l.b16 %v166
    %v263 = vpack.c.b16 %v248, %v247
    %v264 = vpack.c.b16 %v250, %v249
    %v265 = vpack.c.b16 %v252, %v251
    %v266 = vpack.c.b16 %v254, %v253
    %v267 = vpack.c.b16 %v256, %v255
    %v268 = vpack.c.b16 %v258, %v257
    %v269 = vpack.c.b16 %v260, %v259
    %v270 = vpack.c.b16 %v262, %v261
    %279 = vmatpush.bf16.msra.mxu0 %v270
    %280 = vmatpush.bf16.msra.mxu0 %v269
    %281 = vmatpush.bf16.msra.mxu0 %v268
    %282 = vmatpush.bf16.msra.mxu0 %v267
    %283 = vmatpush.bf16.msra.mxu0 %v266
    %284 = vmatpush.bf16.msra.mxu0 %v265
    %285 = vmatpush.bf16.msra.mxu0 %v264
    %286 = vmatpush.bf16.msra.mxu0 %v263
    %287 = vmatmul.bf16.gmra.mxu0 %v215
    %v288 = vpop.f32.mrf.mxu0
    %v289 = vadd.f32 0.0, %v288
    %v290 = vpop.f32.mrf.mxu0
    %v291 = vadd.f32 0.0, %v290
    %292 = vmatmul.bf16.gmra.mxu0 %v216
    %v293 = vpop.f32.mrf.mxu0
    %v294 = vadd.f32 0.0, %v293
    %v295 = vpop.f32.mrf.mxu0
    %v296 = vadd.f32 0.0, %v295
    %297 = vmatmul.bf16.gmra.mxu0 %v217
    %v298 = vpop.f32.mrf.mxu0
    %v299 = vadd.f32 0.0, %v298
    %v300 = vpop.f32.mrf.mxu0
    %v301 = vadd.f32 0.0, %v300
    %302 = vmatmul.bf16.gmra.mxu0 %v218
    %v303 = vpop.f32.mrf.mxu0
    %v304 = vadd.f32 0.0, %v303
    %v305 = vpop.f32.mrf.mxu0
    %v306 = vadd.f32 0.0, %v305
    %307 = vmatmul.bf16.gmra.mxu0 %v219
    %v308 = vpop.f32.mrf.mxu0
    %v309 = vadd.f32 0.0, %v308
    %v310 = vpop.f32.mrf.mxu0
    %v311 = vadd.f32 0.0, %v310
    %312 = vmatmul.bf16.gmra.mxu0 %v220
    %v313 = vpop.f32.mrf.mxu0
    %v314 = vadd.f32 0.0, %v313
    %v315 = vpop.f32.mrf.mxu0
    %v316 = vadd.f32 0.0, %v315
    %317 = vmatmul.bf16.gmra.mxu0 %v221
    %v318 = vpop.f32.mrf.mxu0
    %v319 = vadd.f32 0.0, %v318
    %v320 = vpop.f32.mrf.mxu0
    %v321 = vadd.f32 0.0, %v320
    %322 = vmatmul.bf16.gmra.mxu0 %v222
    %v323 = vpop.f32.mrf.mxu0
    %v324 = vadd.f32 0.0, %v323
    %v325 = vpop.f32.mrf.mxu0
    %v326 = vadd.f32 0.0, %v325
    %327 = vdwg.mxu0
    %v328 = vpack.c.bf16 %v291, %v289
    %v329 = vpack.c.bf16 %v296, %v294
    %v330 = vpack.c.bf16 %v301, %v299
    %v331 = vpack.c.bf16 %v306, %v304
    %v332 = vpack.c.bf16 %v311, %v309
    %v333 = vpack.c.bf16 %v316, %v314
    %v334 = vpack.c.bf16 %v321, %v319
    %v335 = vpack.c.bf16 %v326, %v324
    %v336 = vld [vmem:[#allocation7] sm:$0xf]
    %v337 = vld [vmem:[#allocation7 + $0x4] sm:$0xf]
    %v338 = vld [vmem:[#allocation7 + $0x8] sm:$0xf]
    %v339 = vld [vmem:[#allocation7 + $0xc] sm:$0xf]
    %v340 = vld [vmem:[#allocation7 + $0x10] sm:$0xf]
    %v341 = vld [vmem:[#allocation7 + $0x14] sm:$0xf]
    %v342 = vld [vmem:[#allocation7 + $0x18] sm:$0xf]
    %v343 = vld [vmem:[#allocation7 + $0x1c] sm:$0xf]
    %v344 = vld [vmem:[#allocation7 + $0x20] sm:$0xf]
    %v345 = vld [vmem:[#allocation7 + $0x24] sm:$0xf]
    %v346 = vld [vmem:[#allocation7 + $0x28] sm:$0xf]
    %v347 = vld [vmem:[#allocation7 + $0x2c] sm:$0xf]
    %v348 = vld [vmem:[#allocation7 + $0x30] sm:$0xf]
    %v349 = vld [vmem:[#allocation7 + $0x34] sm:$0xf]
    %v350 = vld [vmem:[#allocation7 + $0x38] sm:$0xf]
    %v351 = vld [vmem:[#allocation7 + $0x3c] sm:$0xf]
    %v352 = vld [vmem:[%s3] sm:$0x1]
    %v354 = vperm.slane %v352, 0
    %v372 = vunpack.c.l.b16 %v336
    %v373 = vunpack.c.l.b16 %v337
    %v374 = vunpack.c.l.b16 %v338
    %v375 = vunpack.c.l.b16 %v339
    %v376 = vunpack.c.l.b16 %v340
    %v377 = vunpack.c.l.b16 %v341
    %v378 = vunpack.c.l.b16 %v342
    %v379 = vunpack.c.l.b16 %v343
    %v380 = vunpack.c.l.b16 %v344
    %v381 = vunpack.c.l.b16 %v345
    %v382 = vunpack.c.l.b16 %v346
    %v383 = vunpack.c.l.b16 %v347
    %v384 = vunpack.c.l.b16 %v348
    %v385 = vunpack.c.l.b16 %v349
    %v386 = vunpack.c.l.b16 %v350
    %v387 = vunpack.c.l.b16 %v351
    %v388 = vpack.c.b16 %v373, %v372
    %v389 = vpack.c.b16 %v375, %v374
    %v390 = vpack.c.b16 %v377, %v376
    %v391 = vpack.c.b16 %v379, %v378
    %v392 = vpack.c.b16 %v381, %v380
    %v393 = vpack.c.b16 %v383, %v382
    %v394 = vpack.c.b16 %v385, %v384
    %v395 = vpack.c.b16 %v387, %v386
    %404 = vmatpush.bf16.msra.mxu0 %v395
    %405 = vmatpush.bf16.msra.mxu0 %v394
    %406 = vmatpush.bf16.msra.mxu0 %v393
    %407 = vmatpush.bf16.msra.mxu0 %v392
    %408 = vmatpush.bf16.msra.mxu0 %v391
    %409 = vmatpush.bf16.msra.mxu0 %v390
    %410 = vmatpush.bf16.msra.mxu0 %v389
    %411 = vmatpush.bf16.msra.mxu0 %v388
    %412 = vmatmul.bf16.gmra.mxu0 %v328
    %v413 = vpop.f32.mrf.mxu0
    %v414 = vadd.f32 %v354, %v413
    %v415 = vpop.f32.mrf.mxu0
    %v416 = vadd.f32 %v354, %v415
    %417 = vmatmul.bf16.gmra.mxu0 %v329
    %v418 = vpop.f32.mrf.mxu0
    %v419 = vadd.f32 %v354, %v418
    %v420 = vpop.f32.mrf.mxu0
    %v421 = vadd.f32 %v354, %v420
    %422 = vmatmul.bf16.gmra.mxu0 %v330
    %v423 = vpop.f32.mrf.mxu0
    %v424 = vadd.f32 %v354, %v423
    %v425 = vpop.f32.mrf.mxu0
    %v426 = vadd.f32 %v354, %v425
    %427 = vmatmul.bf16.gmra.mxu0 %v331
    %v428 = vpop.f32.mrf.mxu0
    %v429 = vadd.f32 %v354, %v428
    %v430 = vpop.f32.mrf.mxu0
    %v431 = vadd.f32 %v354, %v430
    %432 = vmatmul.bf16.gmra.mxu0 %v332
    %v433 = vpop.f32.mrf.mxu0
    %v434 = vadd.f32 %v354, %v433
    %v435 = vpop.f32.mrf.mxu0
    %v436 = vadd.f32 %v354, %v435
    %437 = vmatmul.bf16.gmra.mxu0 %v333
    %v438 = vpop.f32.mrf.mxu0
    %v439 = vadd.f32 %v354, %v438
    %v440 = vpop.f32.mrf.mxu0
    %v441 = vadd.f32 %v354, %v440
    %442 = vmatmul.bf16.gmra.mxu0 %v334
    %v443 = vpop.f32.mrf.mxu0
    %v444 = vadd.f32 %v354, %v443
    %v445 = vpop.f32.mrf.mxu0
    %v446 = vadd.f32 %v354, %v445
    %447 = vmatmul.bf16.gmra.mxu0 %v335
    %v448 = vpop.f32.mrf.mxu0
    %v449 = vadd.f32 %v354, %v448
    %v450 = vpop.f32.mrf.mxu0
    %v451 = vadd.f32 %v354, %v450
    %452 = vdwg.mxu0
    %v453 = vmax.f32 %v414, 0.0
    %v454 = vmax.f32 %v416, 0.0
    %v455 = vmax.f32 %v419, 0.0
    %v456 = vmax.f32 %v421, 0.0
    %v457 = vmax.f32 %v424, 0.0
    %v458 = vmax.f32 %v426, 0.0
    %v459 = vmax.f32 %v429, 0.0
    %v460 = vmax.f32 %v431, 0.0
    %v461 = vmax.f32 %v434, 0.0
    %v462 = vmax.f32 %v436, 0.0
    %v463 = vmax.f32 %v439, 0.0
    %v464 = vmax.f32 %v441, 0.0
    %v465 = vmax.f32 %v444, 0.0
    %v466 = vmax.f32 %v446, 0.0
    %v467 = vmax.f32 %v449, 0.0
    %v468 = vmax.f32 %v451, 0.0
    %v469 = vpack.c.bf16 %v454, %v453
    %v470 = vpack.c.bf16 %v456, %v455
    %v471 = vpack.c.bf16 %v458, %v457
    %v472 = vpack.c.bf16 %v460, %v459
    %v473 = vpack.c.bf16 %v462, %v461
    %v474 = vpack.c.bf16 %v464, %v463
    %v475 = vpack.c.bf16 %v466, %v465
    %v476 = vpack.c.bf16 %v468, %v467
    %477 = vmatpush.bf16.msra.mxu0 %v476
    %478 = vmatpush.bf16.msra.mxu0 %v475
    %479 = vmatpush.bf16.msra.mxu0 %v474
    %480 = vmatpush.bf16.msra.mxu0 %v473
    %481 = vmatpush.bf16.msra.mxu0 %v472
    %482 = vmatpush.bf16.msra.mxu0 %v471
    %483 = vmatpush.bf16.msra.mxu0 %v470
    %484 = vmatpush.bf16.msra.mxu0 %v469
    %485 = vmatmul.bf16.gmra.mxu0 %v215
    %v486 = vpop.f32.mrf.mxu0
    %v487 = vadd.f32 0.0, %v486
    %v488 = vpop.f32.mrf.mxu0
    %v489 = vadd.f32 0.0, %v488
    %490 = vmatmul.bf16.gmra.mxu0 %v216
    %v491 = vpop.f32.mrf.mxu0
    %v492 = vadd.f32 0.0, %v491
    %v493 = vpop.f32.mrf.mxu0
    %v494 = vadd.f32 0.0, %v493
    %495 = vmatmul.bf16.gmra.mxu0 %v217
    %v496 = vpop.f32.mrf.mxu0
    %v497 = vadd.f32 0.0, %v496
    %v498 = vpop.f32.mrf.mxu0
    %v499 = vadd.f32 0.0, %v498
    %500 = vmatmul.bf16.gmra.mxu0 %v218
    %v501 = vpop.f32.mrf.mxu0
    %v502 = vadd.f32 0.0, %v501
    %v503 = vpop.f32.mrf.mxu0
    %v504 = vadd.f32 0.0, %v503
    %505 = vmatmul.bf16.gmra.mxu0 %v219
    %v506 = vpop.f32.mrf.mxu0
    %v507 = vadd.f32 0.0, %v506
    %v508 = vpop.f32.mrf.mxu0
    %v509 = vadd.f32 0.0, %v508
    %510 = vmatmul.bf16.gmra.mxu0 %v220
    %v511 = vpop.f32.mrf.mxu0
    %v512 = vadd.f32 0.0, %v511
    %v513 = vpop.f32.mrf.mxu0
    %v514 = vadd.f32 0.0, %v513
    %515 = vmatmul.bf16.gmra.mxu0 %v221
    %v516 = vpop.f32.mrf.mxu0
    %v517 = vadd.f32 0.0, %v516
    %v518 = vpop.f32.mrf.mxu0
    %v519 = vadd.f32 0.0, %v518
    %520 = vmatmul.bf16.gmra.mxu0 %v222
    %v521 = vpop.f32.mrf.mxu0
    %v522 = vadd.f32 0.0, %v521
    %v523 = vpop.f32.mrf.mxu0
    %v524 = vadd.f32 0.0, %v523
    %525 = vdwg.mxu0
    %v526 = vpack.c.bf16 %v489, %v487
    %v527 = vpack.c.bf16 %v494, %v492
    %v528 = vpack.c.bf16 %v499, %v497
    %v529 = vpack.c.bf16 %v504, %v502
    %v530 = vpack.c.bf16 %v509, %v507
    %v531 = vpack.c.bf16 %v514, %v512
    %v532 = vpack.c.bf16 %v519, %v517
    %v533 = vpack.c.bf16 %v524, %v522
    %v534 = vld [vmem:[#allocation8] sm:$0xf]
    %v535 = vld [vmem:[#allocation8 + $0x4] sm:$0xf]
    %v536 = vld [vmem:[#allocation8 + $0x8] sm:$0xf]
    %v537 = vld [vmem:[#allocation8 + $0xc] sm:$0xf]
    %v538 = vld [vmem:[#allocation8 + $0x10] sm:$0xf]
    %v539 = vld [vmem:[#allocation8 + $0x14] sm:$0xf]
    %v540 = vld [vmem:[#allocation8 + $0x18] sm:$0xf]
    %v541 = vld [vmem:[#allocation8 + $0x1c] sm:$0xf]
    %v542 = vld [vmem:[#allocation8 + $0x20] sm:$0xf]
    %v543 = vld [vmem:[#allocation8 + $0x24] sm:$0xf]
    %v544 = vld [vmem:[#allocation8 + $0x28] sm:$0xf]
    %v545 = vld [vmem:[#allocation8 + $0x2c] sm:$0xf]
    %v546 = vld [vmem:[#allocation8 + $0x30] sm:$0xf]
    %v547 = vld [vmem:[#allocation8 + $0x34] sm:$0xf]
    %v548 = vld [vmem:[#allocation8 + $0x38] sm:$0xf]
    %v549 = vld [vmem:[#allocation8 + $0x3c] sm:$0xf]
    %v550 = vld [vmem:[%s5] sm:$0x1]
    %v552 = vperm.slane %v550, 0
    %v570 = vunpack.c.l.b16 %v534
    %v571 = vunpack.c.l.b16 %v535
    %v572 = vunpack.c.l.b16 %v536
    %v573 = vunpack.c.l.b16 %v537
    %v574 = vunpack.c.l.b16 %v538
    %v575 = vunpack.c.l.b16 %v539
    %v576 = vunpack.c.l.b16 %v540
    %v577 = vunpack.c.l.b16 %v541
    %v578 = vunpack.c.l.b16 %v542
    %v579 = vunpack.c.l.b16 %v543
    %v580 = vunpack.c.l.b16 %v544
    %v581 = vunpack.c.l.b16 %v545
    %v582 = vunpack.c.l.b16 %v546
    %v583 = vunpack.c.l.b16 %v547
    %v584 = vunpack.c.l.b16 %v548
    %v585 = vunpack.c.l.b16 %v549
    %v586 = vpack.c.b16 %v571, %v570
    %v587 = vpack.c.b16 %v573, %v572
    %v588 = vpack.c.b16 %v575, %v574
    %v589 = vpack.c.b16 %v577, %v576
    %v590 = vpack.c.b16 %v579, %v578
    %v591 = vpack.c.b16 %v581, %v580
    %v592 = vpack.c.b16 %v583, %v582
    %v593 = vpack.c.b16 %v585, %v584
    %602 = vmatpush.bf16.msra.mxu0 %v593
    %603 = vmatpush.bf16.msra.mxu0 %v592
    %604 = vmatpush.bf16.msra.mxu0 %v591
    %605 = vmatpush.bf16.msra.mxu0 %v590
    %606 = vmatpush.bf16.msra.mxu0 %v589
    %607 = vmatpush.bf16.msra.mxu0 %v588
    %608 = vmatpush.bf16.msra.mxu0 %v587
    %609 = vmatpush.bf16.msra.mxu0 %v586
    %610 = vmatmul.bf16.gmra.mxu0 %v526
    %v611 = vpop.f32.mrf.mxu0
    %v612 = vadd.f32 %v552, %v611
    %v613 = vpop.f32.mrf.mxu0
    %v614 = vadd.f32 %v552, %v613
    %615 = vmatmul.bf16.gmra.mxu0 %v527
    %v616 = vpop.f32.mrf.mxu0
    %v617 = vadd.f32 %v552, %v616
    %v618 = vpop.f32.mrf.mxu0
    %v619 = vadd.f32 %v552, %v618
    %620 = vmatmul.bf16.gmra.mxu0 %v528
    %v621 = vpop.f32.mrf.mxu0
    %v622 = vadd.f32 %v552, %v621
    %v623 = vpop.f32.mrf.mxu0
    %v624 = vadd.f32 %v552, %v623
    %625 = vmatmul.bf16.gmra.mxu0 %v529
    %v626 = vpop.f32.mrf.mxu0
    %v627 = vadd.f32 %v552, %v626
    %v628 = vpop.f32.mrf.mxu0
    %v629 = vadd.f32 %v552, %v628
    %630 = vmatmul.bf16.gmra.mxu0 %v530
    %v631 = vpop.f32.mrf.mxu0
    %v632 = vadd.f32 %v552, %v631
    %v633 = vpop.f32.mrf.mxu0
    %v634 = vadd.f32 %v552, %v633
    %635 = vmatmul.bf16.gmra.mxu0 %v531
    %v636 = vpop.f32.mrf.mxu0
    %v637 = vadd.f32 %v552, %v636
    %v638 = vpop.f32.mrf.mxu0
    %v639 = vadd.f32 %v552, %v638
    %640 = vmatmul.bf16.gmra.mxu0 %v532
    %v641 = vpop.f32.mrf.mxu0
    %v642 = vadd.f32 %v552, %v641
    %v643 = vpop.f32.mrf.mxu0
    %v644 = vadd.f32 %v552, %v643
    %645 = vmatmul.bf16.gmra.mxu0 %v533
    %v646 = vpop.f32.mrf.mxu0
    %v647 = vadd.f32 %v552, %v646
    %v648 = vpop.f32.mrf.mxu0
    %v649 = vadd.f32 %v552, %v648
    %650 = vdwg.mxu0
    %v651 = vmax.f32 %v612, 0.0
    %v652 = vmax.f32 %v614, 0.0
    %v653 = vmax.f32 %v617, 0.0
    %v654 = vmax.f32 %v619, 0.0
    %v655 = vmax.f32 %v622, 0.0
    %v656 = vmax.f32 %v624, 0.0
    %v657 = vmax.f32 %v627, 0.0
    %v658 = vmax.f32 %v629, 0.0
    %v659 = vmax.f32 %v632, 0.0
    %v660 = vmax.f32 %v634, 0.0
    %v661 = vmax.f32 %v637, 0.0
    %v662 = vmax.f32 %v639, 0.0
    %v663 = vmax.f32 %v642, 0.0
    %v664 = vmax.f32 %v644, 0.0
    %v665 = vmax.f32 %v647, 0.0
    %v666 = vmax.f32 %v649, 0.0
    %v667 = vpack.c.bf16 %v652, %v651
    %v668 = vpack.c.bf16 %v654, %v653
    %v669 = vpack.c.bf16 %v656, %v655
    %v670 = vpack.c.bf16 %v658, %v657
    %v671 = vpack.c.bf16 %v660, %v659
    %v672 = vpack.c.bf16 %v662, %v661
    %v673 = vpack.c.bf16 %v664, %v663
    %v674 = vpack.c.bf16 %v666, %v665
    %675 = vmatpush.bf16.msra.mxu0 %v674
    %676 = vmatpush.bf16.msra.mxu0 %v673
    %677 = vmatpush.bf16.msra.mxu0 %v672
    %678 = vmatpush.bf16.msra.mxu0 %v671
    %679 = vmatpush.bf16.msra.mxu0 %v670
    %680 = vmatpush.bf16.msra.mxu0 %v669
    %681 = vmatpush.bf16.msra.mxu0 %v668
    %682 = vmatpush.bf16.msra.mxu0 %v667
    %683 = vmatmul.bf16.gmra.mxu0 %v215
    %v684 = vpop.f32.mrf.mxu0
    %v685 = vadd.f32 0.0, %v684
    %v686 = vpop.f32.mrf.mxu0
    %v687 = vadd.f32 0.0, %v686
    %688 = vmatmul.bf16.gmra.mxu0 %v216
    %v689 = vpop.f32.mrf.mxu0
    %v690 = vadd.f32 0.0, %v689
    %v691 = vpop.f32.mrf.mxu0
    %v692 = vadd.f32 0.0, %v691
    %693 = vmatmul.bf16.gmra.mxu0 %v217
    %v694 = vpop.f32.mrf.mxu0
    %v695 = vadd.f32 0.0, %v694
    %v696 = vpop.f32.mrf.mxu0
    %v697 = vadd.f32 0.0, %v696
    %698 = vmatmul.bf16.gmra.mxu0 %v218
    %v699 = vpop.f32.mrf.mxu0
    %v700 = vadd.f32 0.0, %v699
    %v701 = vpop.f32.mrf.mxu0
    %v702 = vadd.f32 0.0, %v701
    %703 = vmatmul.bf16.gmra.mxu0 %v219
    %v704 = vpop.f32.mrf.mxu0
    %v705 = vadd.f32 0.0, %v704
    %v706 = vpop.f32.mrf.mxu0
    %v707 = vadd.f32 0.0, %v706
    %708 = vmatmul.bf16.gmra.mxu0 %v220
    %v709 = vpop.f32.mrf.mxu0
    %v710 = vadd.f32 0.0, %v709
    %v711 = vpop.f32.mrf.mxu0
    %v712 = vadd.f32 0.0, %v711
    %713 = vmatmul.bf16.gmra.mxu0 %v221
    %v714 = vpop.f32.mrf.mxu0
    %v715 = vadd.f32 0.0, %v714
    %v716 = vpop.f32.mrf.mxu0
    %v717 = vadd.f32 0.0, %v716
    %718 = vmatmul.bf16.gmra.mxu0 %v222
    %v719 = vpop.f32.mrf.mxu0
    %v720 = vadd.f32 0.0, %v719
    %v721 = vpop.f32.mrf.mxu0
    %v722 = vadd.f32 0.0, %v721
    %723 = vdwg.mxu0
    %v724 = vpack.c.bf16 %v687, %v685
    %v725 = vpack.c.bf16 %v692, %v690
    %v726 = vpack.c.bf16 %v697, %v695
    %v727 = vpack.c.bf16 %v702, %v700
    %v728 = vpack.c.bf16 %v707, %v705
    %v729 = vpack.c.bf16 %v712, %v710
    %v730 = vpack.c.bf16 %v717, %v715
    %v731 = vpack.c.bf16 %v722, %v720
    %v732 = vld [vmem:[#allocation10] sm:$0xf]
    %v733 = vld [vmem:[#allocation10 + $0x4] sm:$0xf]
    %v734 = vld [vmem:[#allocation10 + $0x8] sm:$0xf]
    %v735 = vld [vmem:[#allocation10 + $0xc] sm:$0xf]
    %v736 = vld [vmem:[#allocation10 + $0x10] sm:$0xf]
    %v737 = vld [vmem:[#allocation10 + $0x14] sm:$0xf]
    %v738 = vld [vmem:[#allocation10 + $0x18] sm:$0xf]
    %v739 = vld [vmem:[#allocation10 + $0x1c] sm:$0xf]
    %v740 = vld [vmem:[#allocation10 + $0x20] sm:$0xf]
    %v741 = vld [vmem:[#allocation10 + $0x24] sm:$0xf]
    %v742 = vld [vmem:[#allocation10 + $0x28] sm:$0xf]
    %v743 = vld [vmem:[#allocation10 + $0x2c] sm:$0xf]
    %v744 = vld [vmem:[#allocation10 + $0x30] sm:$0xf]
    %v745 = vld [vmem:[#allocation10 + $0x34] sm:$0xf]
    %v746 = vld [vmem:[#allocation10 + $0x38] sm:$0xf]
    %v747 = vld [vmem:[#allocation10 + $0x3c] sm:$0xf]
    %v748 = vld [vmem:[%s7] sm:$0x1]
    %v750 = vperm.slane %v748, 0
    %v768 = vunpack.c.l.b16 %v732
    %v769 = vunpack.c.l.b16 %v733
    %v770 = vunpack.c.l.b16 %v734
    %v771 = vunpack.c.l.b16 %v735
    %v772 = vunpack.c.l.b16 %v736
    %v773 = vunpack.c.l.b16 %v737
    %v774 = vunpack.c.l.b16 %v738
    %v775 = vunpack.c.l.b16 %v739
    %v776 = vunpack.c.l.b16 %v740
    %v777 = vunpack.c.l.b16 %v741
    %v778 = vunpack.c.l.b16 %v742
    %v779 = vunpack.c.l.b16 %v743
    %v780 = vunpack.c.l.b16 %v744
    %v781 = vunpack.c.l.b16 %v745
    %v782 = vunpack.c.l.b16 %v746
    %v783 = vunpack.c.l.b16 %v747
    %v784 = vpack.c.b16 %v769, %v768
    %v785 = vpack.c.b16 %v771, %v770
    %v786 = vpack.c.b16 %v773, %v772
    %v787 = vpack.c.b16 %v775, %v774
    %v788 = vpack.c.b16 %v777, %v776
    %v789 = vpack.c.b16 %v779, %v778
    %v790 = vpack.c.b16 %v781, %v780
    %v791 = vpack.c.b16 %v783, %v782
    %800 = vmatpush.bf16.msra.mxu0 %v791
    %801 = vmatpush.bf16.msra.mxu0 %v790
    %802 = vmatpush.bf16.msra.mxu0 %v789
    %803 = vmatpush.bf16.msra.mxu0 %v788
    %804 = vmatpush.bf16.msra.mxu0 %v787
    %805 = vmatpush.bf16.msra.mxu0 %v786
    %806 = vmatpush.bf16.msra.mxu0 %v785
    %807 = vmatpush.bf16.msra.mxu0 %v784
    %808 = vmatmul.bf16.gmra.mxu0 %v724
    %v809 = vpop.f32.mrf.mxu0
    %v810 = vadd.f32 %v750, %v809
    %v811 = vpop.f32.mrf.mxu0
    %v812 = vadd.f32 %v750, %v811
    %813 = vmatmul.bf16.gmra.mxu0 %v725
    %v814 = vpop.f32.mrf.mxu0
    %v815 = vadd.f32 %v750, %v814
    %v816 = vpop.f32.mrf.mxu0
    %v817 = vadd.f32 %v750, %v816
    %818 = vmatmul.bf16.gmra.mxu0 %v726
    %v819 = vpop.f32.mrf.mxu0
    %v820 = vadd.f32 %v750, %v819
    %v821 = vpop.f32.mrf.mxu0
    %v822 = vadd.f32 %v750, %v821
    %823 = vmatmul.bf16.gmra.mxu0 %v727
    %v824 = vpop.f32.mrf.mxu0
    %v825 = vadd.f32 %v750, %v824
    %v826 = vpop.f32.mrf.mxu0
    %v827 = vadd.f32 %v750, %v826
    %828 = vmatmul.bf16.gmra.mxu0 %v728
    %v829 = vpop.f32.mrf.mxu0
    %v830 = vadd.f32 %v750, %v829
    %v831 = vpop.f32.mrf.mxu0
    %v832 = vadd.f32 %v750, %v831
    %833 = vmatmul.bf16.gmra.mxu0 %v729
    %v834 = vpop.f32.mrf.mxu0
    %v835 = vadd.f32 %v750, %v834
    %v836 = vpop.f32.mrf.mxu0
    %v837 = vadd.f32 %v750, %v836
    %838 = vmatmul.bf16.gmra.mxu0 %v730
    %v839 = vpop.f32.mrf.mxu0
    %v840 = vadd.f32 %v750, %v839
    %v841 = vpop.f32.mrf.mxu0
    %v842 = vadd.f32 %v750, %v841
    %843 = vmatmul.bf16.gmra.mxu0 %v731
    %v844 = vpop.f32.mrf.mxu0
    %v845 = vadd.f32 %v750, %v844
    %v846 = vpop.f32.mrf.mxu0
    %v847 = vadd.f32 %v750, %v846
    %848 = vdwg.mxu0
    %v849 = vmax.f32 %v810, 0.0
    %v850 = vmax.f32 %v812, 0.0
    %v851 = vmax.f32 %v815, 0.0
    %v852 = vmax.f32 %v817, 0.0
    %v853 = vmax.f32 %v820, 0.0
    %v854 = vmax.f32 %v822, 0.0
    %v855 = vmax.f32 %v825, 0.0
    %v856 = vmax.f32 %v827, 0.0
    %v857 = vmax.f32 %v830, 0.0
    %v858 = vmax.f32 %v832, 0.0
    %v859 = vmax.f32 %v835, 0.0
    %v860 = vmax.f32 %v837, 0.0
    %v861 = vmax.f32 %v840, 0.0
    %v862 = vmax.f32 %v842, 0.0
    %v863 = vmax.f32 %v845, 0.0
    %v864 = vmax.f32 %v847, 0.0
    %v865 = vpack.c.bf16 %v850, %v849
    %v866 = vpack.c.bf16 %v852, %v851
    %v867 = vpack.c.bf16 %v854, %v853
    %v868 = vpack.c.bf16 %v856, %v855
    %v869 = vpack.c.bf16 %v858, %v857
    %v870 = vpack.c.bf16 %v860, %v859
    %v871 = vpack.c.bf16 %v862, %v861
    %v872 = vpack.c.bf16 %v864, %v863
    %873 = vmatpush.bf16.msra.mxu0 %v872
    %874 = vmatpush.bf16.msra.mxu0 %v871
    %875 = vmatpush.bf16.msra.mxu0 %v870
    %876 = vmatpush.bf16.msra.mxu0 %v869
    %877 = vmatpush.bf16.msra.mxu0 %v868
    %878 = vmatpush.bf16.msra.mxu0 %v867
    %879 = vmatpush.bf16.msra.mxu0 %v866
    %880 = vmatpush.bf16.msra.mxu0 %v865
    %881 = vmatmul.bf16.gmra.mxu0 %v215
    %v882 = vpop.f32.mrf.mxu0
    %v883 = vadd.f32 0.0, %v882
    %v884 = vpop.f32.mrf.mxu0
    %v885 = vadd.f32 0.0, %v884
    %886 = vmatmul.bf16.gmra.mxu0 %v216
    %v887 = vpop.f32.mrf.mxu0
    %v888 = vadd.f32 0.0, %v887
    %v889 = vpop.f32.mrf.mxu0
    %v890 = vadd.f32 0.0, %v889
    %891 = vmatmul.bf16.gmra.mxu0 %v217
    %v892 = vpop.f32.mrf.mxu0
    %v893 = vadd.f32 0.0, %v892
    %v894 = vpop.f32.mrf.mxu0
    %v895 = vadd.f32 0.0, %v894
    %896 = vmatmul.bf16.gmra.mxu0 %v218
    %v897 = vpop.f32.mrf.mxu0
    %v898 = vadd.f32 0.0, %v897
    %v899 = vpop.f32.mrf.mxu0
    %v900 = vadd.f32 0.0, %v899
    %901 = vmatmul.bf16.gmra.mxu0 %v219
    %v902 = vpop.f32.mrf.mxu0
    %v903 = vadd.f32 0.0, %v902
    %v904 = vpop.f32.mrf.mxu0
    %v905 = vadd.f32 0.0, %v904
    %906 = vmatmul.bf16.gmra.mxu0 %v220
    %v907 = vpop.f32.mrf.mxu0
    %v908 = vadd.f32 0.0, %v907
    %v909 = vpop.f32.mrf.mxu0
    %v910 = vadd.f32 0.0, %v909
    %911 = vmatmul.bf16.gmra.mxu0 %v221
    %v912 = vpop.f32.mrf.mxu0
    %v913 = vadd.f32 0.0, %v912
    %v914 = vpop.f32.mrf.mxu0
    %v915 = vadd.f32 0.0, %v914
    %916 = vmatmul.bf16.gmra.mxu0 %v222
    %v917 = vpop.f32.mrf.mxu0
    %v918 = vadd.f32 0.0, %v917
    %v919 = vpop.f32.mrf.mxu0
    %v920 = vadd.f32 0.0, %v919
    %921 = vdwg.mxu0
    %v922 = vpack.c.bf16 %v885, %v883
    %v923 = vpack.c.bf16 %v890, %v888
    %v924 = vpack.c.bf16 %v895, %v893
    %v925 = vpack.c.bf16 %v900, %v898
    %v926 = vpack.c.bf16 %v905, %v903
    %v927 = vpack.c.bf16 %v910, %v908
    %v928 = vpack.c.bf16 %v915, %v913
    %v929 = vpack.c.bf16 %v920, %v918
    %v930 = vld [vmem:[#allocation11] sm:$0xf]
    %v931 = vld [vmem:[#allocation11 + $0x4] sm:$0xf]
    %v932 = vld [vmem:[#allocation11 + $0x8] sm:$0xf]
    %v933 = vld [vmem:[#allocation11 + $0xc] sm:$0xf]
    %v934 = vld [vmem:[#allocation11 + $0x10] sm:$0xf]
    %v935 = vld [vmem:[#allocation11 + $0x14] sm:$0xf]
    %v936 = vld [vmem:[#allocation11 + $0x18] sm:$0xf]
    %v937 = vld [vmem:[#allocation11 + $0x1c] sm:$0xf]
    %v938 = vld [vmem:[#allocation11 + $0x20] sm:$0xf]
    %v939 = vld [vmem:[#allocation11 + $0x24] sm:$0xf]
    %v940 = vld [vmem:[#allocation11 + $0x28] sm:$0xf]
    %v941 = vld [vmem:[#allocation11 + $0x2c] sm:$0xf]
    %v942 = vld [vmem:[#allocation11 + $0x30] sm:$0xf]
    %v943 = vld [vmem:[#allocation11 + $0x34] sm:$0xf]
    %v944 = vld [vmem:[#allocation11 + $0x38] sm:$0xf]
    %v945 = vld [vmem:[#allocation11 + $0x3c] sm:$0xf]
    %v946 = vld [vmem:[%s9] sm:$0x1]
    %v948 = vperm.slane %v946, 0
    %v966 = vunpack.c.l.b16 %v930
    %v967 = vunpack.c.l.b16 %v931
    %v968 = vunpack.c.l.b16 %v932
    %v969 = vunpack.c.l.b16 %v933
    %v970 = vunpack.c.l.b16 %v934
    %v971 = vunpack.c.l.b16 %v935
    %v972 = vunpack.c.l.b16 %v936
    %v973 = vunpack.c.l.b16 %v937
    %v974 = vunpack.c.l.b16 %v938
    %v975 = vunpack.c.l.b16 %v939
    %v976 = vunpack.c.l.b16 %v940
    %v977 = vunpack.c.l.b16 %v941
    %v978 = vunpack.c.l.b16 %v942
    %v979 = vunpack.c.l.b16 %v943
    %v980 = vunpack.c.l.b16 %v944
    %v981 = vunpack.c.l.b16 %v945
    %v982 = vpack.c.b16 %v967, %v966
    %v983 = vpack.c.b16 %v969, %v968
    %v984 = vpack.c.b16 %v971, %v970
    %v985 = vpack.c.b16 %v973, %v972
    %v986 = vpack.c.b16 %v975, %v974
    %v987 = vpack.c.b16 %v977, %v976
    %v988 = vpack.c.b16 %v979, %v978
    %v989 = vpack.c.b16 %v981, %v980
    %998 = vmatpush.bf16.msra.mxu0 %v989
    %999 = vmatpush.bf16.msra.mxu0 %v988
    %1000 = vmatpush.bf16.msra.mxu0 %v987
    %1001 = vmatpush.bf16.msra.mxu0 %v986
    %1002 = vmatpush.bf16.msra.mxu0 %v985
    %1003 = vmatpush.bf16.msra.mxu0 %v984
    %1004 = vmatpush.bf16.msra.mxu0 %v983
    %1005 = vmatpush.bf16.msra.mxu0 %v982
    %1006 = vmatmul.bf16.gmra.mxu0 %v922
    %v1007 = vpop.f32.mrf.mxu0
    %v1008 = vadd.f32 %v948, %v1007
    %v1009 = vpop.f32.mrf.mxu0
    %v1010 = vadd.f32 %v948, %v1009
    %1011 = vmatmul.bf16.gmra.mxu0 %v923
    %v1012 = vpop.f32.mrf.mxu0
    %v1013 = vadd.f32 %v948, %v1012
    %v1014 = vpop.f32.mrf.mxu0
    %v1015 = vadd.f32 %v948, %v1014
    %1016 = vmatmul.bf16.gmra.mxu0 %v924
    %v1017 = vpop.f32.mrf.mxu0
    %v1018 = vadd.f32 %v948, %v1017
    %v1019 = vpop.f32.mrf.mxu0
    %v1020 = vadd.f32 %v948, %v1019
    %1021 = vmatmul.bf16.gmra.mxu0 %v925
    %v1022 = vpop.f32.mrf.mxu0
    %v1023 = vadd.f32 %v948, %v1022
    %v1024 = vpop.f32.mrf.mxu0
    %v1025 = vadd.f32 %v948, %v1024
    %1026 = vmatmul.bf16.gmra.mxu0 %v926
    %v1027 = vpop.f32.mrf.mxu0
    %v1028 = vadd.f32 %v948, %v1027
    %v1029 = vpop.f32.mrf.mxu0
    %v1030 = vadd.f32 %v948, %v1029
    %1031 = vmatmul.bf16.gmra.mxu0 %v927
    %v1032 = vpop.f32.mrf.mxu0
    %v1033 = vadd.f32 %v948, %v1032
    %v1034 = vpop.f32.mrf.mxu0
    %v1035 = vadd.f32 %v948, %v1034
    %1036 = vmatmul.bf16.gmra.mxu0 %v928
    %v1037 = vpop.f32.mrf.mxu0
    %v1038 = vadd.f32 %v948, %v1037
    %v1039 = vpop.f32.mrf.mxu0
    %v1040 = vadd.f32 %v948, %v1039
    %1041 = vmatmul.bf16.gmra.mxu0 %v929
    %v1042 = vpop.f32.mrf.mxu0
    %v1043 = vadd.f32 %v948, %v1042
    %v1044 = vpop.f32.mrf.mxu0
    %v1045 = vadd.f32 %v948, %v1044
    %1046 = vdwg.mxu0
    %v1047 = vmax.f32 %v1008, 0.0
    %v1048 = vmax.f32 %v1010, 0.0
    %v1049 = vmax.f32 %v1013, 0.0
    %v1050 = vmax.f32 %v1015, 0.0
    %v1051 = vmax.f32 %v1018, 0.0
    %v1052 = vmax.f32 %v1020, 0.0
    %v1053 = vmax.f32 %v1023, 0.0
    %v1054 = vmax.f32 %v1025, 0.0
    %v1055 = vmax.f32 %v1028, 0.0
    %v1056 = vmax.f32 %v1030, 0.0
    %v1057 = vmax.f32 %v1033, 0.0
    %v1058 = vmax.f32 %v1035, 0.0
    %v1059 = vmax.f32 %v1038, 0.0
    %v1060 = vmax.f32 %v1040, 0.0
    %v1061 = vmax.f32 %v1043, 0.0
    %v1062 = vmax.f32 %v1045, 0.0
    %v1063 = vpack.c.bf16 %v1048, %v1047
    %v1064 = vpack.c.bf16 %v1050, %v1049
    %v1065 = vpack.c.bf16 %v1052, %v1051
    %v1066 = vpack.c.bf16 %v1054, %v1053
    %v1067 = vpack.c.bf16 %v1056, %v1055
    %v1068 = vpack.c.bf16 %v1058, %v1057
    %v1069 = vpack.c.bf16 %v1060, %v1059
    %v1070 = vpack.c.bf16 %v1062, %v1061
    %v1071 = vld [vmem:[#allocation13] sm:$0xf]
    %v1072 = vld [vmem:[#allocation13 + $0x4] sm:$0xf]
    %v1073 = vld [vmem:[#allocation13 + $0x8] sm:$0xf]
    %v1074 = vld [vmem:[#allocation13 + $0xc] sm:$0xf]
    %v1075 = vld [vmem:[#allocation13 + $0x10] sm:$0xf]
    %v1076 = vld [vmem:[#allocation13 + $0x14] sm:$0xf]
    %v1077 = vld [vmem:[#allocation13 + $0x18] sm:$0xf]
    %v1078 = vld [vmem:[#allocation13 + $0x1c] sm:$0xf]
    %v1079 = vld [vmem:[#allocation13 + $0x20] sm:$0xf]
    %v1080 = vld [vmem:[#allocation13 + $0x24] sm:$0xf]
    %v1081 = vld [vmem:[#allocation13 + $0x28] sm:$0xf]
    %v1082 = vld [vmem:[#allocation13 + $0x2c] sm:$0xf]
    %v1083 = vld [vmem:[#allocation13 + $0x30] sm:$0xf]
    %v1084 = vld [vmem:[#allocation13 + $0x34] sm:$0xf]
    %v1085 = vld [vmem:[#allocation13 + $0x38] sm:$0xf]
    %v1086 = vld [vmem:[#allocation13 + $0x3c] sm:$0xf]
    %v1087 = vld [vmem:[%s11] sm:$0x1]
    %v1089 = vperm.slane %v1087, 0
    %v1107 = vunpack.c.l.b16 %v1071
    %v1108 = vunpack.c.l.b16 %v1072
    %v1109 = vunpack.c.l.b16 %v1073
    %v1110 = vunpack.c.l.b16 %v1074
    %v1111 = vunpack.c.l.b16 %v1075
    %v1112 = vunpack.c.l.b16 %v1076
    %v1113 = vunpack.c.l.b16 %v1077
    %v1114 = vunpack.c.l.b16 %v1078
    %v1115 = vunpack.c.l.b16 %v1079
    %v1116 = vunpack.c.l.b16 %v1080
    %v1117 = vunpack.c.l.b16 %v1081
    %v1118 = vunpack.c.l.b16 %v1082
    %v1119 = vunpack.c.l.b16 %v1083
    %v1120 = vunpack.c.l.b16 %v1084
    %v1121 = vunpack.c.l.b16 %v1085
    %v1122 = vunpack.c.l.b16 %v1086
    %v1123 = vpack.c.b16 %v1108, %v1107
    %v1124 = vpack.c.b16 %v1110, %v1109
    %v1125 = vpack.c.b16 %v1112, %v1111
    %v1126 = vpack.c.b16 %v1114, %v1113
    %v1127 = vpack.c.b16 %v1116, %v1115
    %v1128 = vpack.c.b16 %v1118, %v1117
    %v1129 = vpack.c.b16 %v1120, %v1119
    %v1130 = vpack.c.b16 %v1122, %v1121
    %1139 = vmatpush.bf16.msra.mxu0 %v1130
    %1140 = vmatpush.bf16.msra.mxu0 %v1129
    %1141 = vmatpush.bf16.msra.mxu0 %v1128
    %1142 = vmatpush.bf16.msra.mxu0 %v1127
    %1143 = vmatpush.bf16.msra.mxu0 %v1126
    %1144 = vmatpush.bf16.msra.mxu0 %v1125
    %1145 = vmatpush.bf16.msra.mxu0 %v1124
    %1146 = vmatpush.bf16.msra.mxu0 %v1123
    %1147 = vmatmul.bf16.gmra.mxu0 %v1063
    %v1148 = vpop.f32.mrf.mxu0
    %v1149 = vadd.f32 %v1089, %v1148
    %v1150 = vpop.f32.mrf.mxu0
    %v1151 = vadd.f32 %v1089, %v1150
    %1152 = vmatmul.bf16.gmra.mxu0 %v1064
    %v1153 = vpop.f32.mrf.mxu0
    %v1154 = vadd.f32 %v1089, %v1153
    %v1155 = vpop.f32.mrf.mxu0
    %v1156 = vadd.f32 %v1089, %v1155
    %1157 = vmatmul.bf16.gmra.mxu0 %v1065
    %v1158 = vpop.f32.mrf.mxu0
    %v1159 = vadd.f32 %v1089, %v1158
    %v1160 = vpop.f32.mrf.mxu0
    %v1161 = vadd.f32 %v1089, %v1160
    %1162 = vmatmul.bf16.gmra.mxu0 %v1066
    %v1163 = vpop.f32.mrf.mxu0
    %v1164 = vadd.f32 %v1089, %v1163
    %v1165 = vpop.f32.mrf.mxu0
    %v1166 = vadd.f32 %v1089, %v1165
    %1167 = vmatmul.bf16.gmra.mxu0 %v1067
    %v1168 = vpop.f32.mrf.mxu0
    %v1169 = vadd.f32 %v1089, %v1168
    %v1170 = vpop.f32.mrf.mxu0
    %v1171 = vadd.f32 %v1089, %v1170
    %1172 = vmatmul.bf16.gmra.mxu0 %v1068
    %v1173 = vpop.f32.mrf.mxu0
    %v1174 = vadd.f32 %v1089, %v1173
    %v1175 = vpop.f32.mrf.mxu0
    %v1176 = vadd.f32 %v1089, %v1175
    %1177 = vmatmul.bf16.gmra.mxu0 %v1069
    %v1178 = vpop.f32.mrf.mxu0
    %v1179 = vadd.f32 %v1089, %v1178
    %v1180 = vpop.f32.mrf.mxu0
    %v1181 = vadd.f32 %v1089, %v1180
    %1182 = vmatmul.bf16.gmra.mxu0 %v1070
    %v1183 = vpop.f32.mrf.mxu0
    %v1184 = vadd.f32 %v1089, %v1183
    %v1185 = vpop.f32.mrf.mxu0
    %v1186 = vadd.f32 %v1089, %v1185
    %1187 = vdwg.mxu0
    %1188 = vst [vmem:[#allocation14] sm:$0xff] %v1149
    %1189 = vst [vmem:[#allocation14 + $0x8] sm:$0xff] %v1151
    %1190 = vst [vmem:[#allocation14 + $0x10] sm:$0xff] %v1154
    %1191 = vst [vmem:[#allocation14 + $0x18] sm:$0xff] %v1156
    %1192 = vst [vmem:[#allocation14 + $0x20] sm:$0xff] %v1159
    %1193 = vst [vmem:[#allocation14 + $0x28] sm:$0xff] %v1161
    %1194 = vst [vmem:[#allocation14 + $0x30] sm:$0xff] %v1164
    %1195 = vst [vmem:[#allocation14 + $0x38] sm:$0xff] %v1166
    %1196 = vst [vmem:[#allocation14 + $0x40] sm:$0xff] %v1169
    %1197 = vst [vmem:[#allocation14 + $0x48] sm:$0xff] %v1171
    %1198 = vst [vmem:[#allocation14 + $0x50] sm:$0xff] %v1174
    %1199 = vst [vmem:[#allocation14 + $0x58] sm:$0xff] %v1176
    %1200 = vst [vmem:[#allocation14 + $0x60] sm:$0xff] %v1179
    %1201 = vst [vmem:[#allocation14 + $0x68] sm:$0xff] %v1181
    %1202 = vst [vmem:[#allocation14 + $0x70] sm:$0xff] %v1184
    %1203 = vst [vmem:[#allocation14 + $0x78] sm:$0xff] %v1186
    // Predicated region
    $region78: #{tpu_custom_call.1} parent=1 // pred_check
      _
    $region79: #{tpu_custom_call.1} parent=1 // pred_check_branch
      %1205 = sbr.rel (0) target = $region81
    $region80: #{tpu_custom_call.1} parent=1 // pred_region
      %1207 = vsyncadd [#allocation4], 0
      %s1208 = sshll.u32 [#allocation14], 4
      %s1209 = int_to_ptr.vmem [resolvable:$true] %s1208
      %s1210 = sshll.u32 %s12, 4
      %s1211 = int_to_ptr.hbm [resolvable:$true] %s1210
      %1216 = dma.vmem_to_hbm [thread:$0]  %s1209, 2048, %s1211, [#allocation4], 128, 128, 8
    $region81: #{tpu_custom_call.1} parent=1 // pred_fallthru
      _
    // Predicated region
    $region82: #{tpu_custom_call.1} parent=1 // pred_check
      _
    $region83: #{tpu_custom_call.1} parent=1 // pred_check_branch
      %1218 = sbr.rel (0) target = $region85
    $region84: #{tpu_custom_call.1} parent=1 // pred_region
      %1220 = dma.done [#allocation4], 2048
    $region85: #{tpu_custom_call.1} parent=1 // pred_fallthru
      _
    %1221 = vsyncpa [#allocation3], 1
    %1222 = vsyncpa [#allocation6], 1
    %1223 = vsyncpa [#allocation9], 1
    %1224 = vsyncpa [#allocation12], 1
    %1225 = vsyncpa [#allocation4], 1

</llo_original>
